<compile_context>
chip_gen: v6e
topology: v6e:2x2x1
jax: 0.10.0
libtpu: 0.0.40
codegen_flags: <defaults>
</compile_context>

<pallas_src>
import functools

import jax
import jax.numpy as jnp
import numpy as np
from jax.experimental import pallas as pl
from jax.experimental.pallas import tpu as pltpu


def _sigmoid(x):
    return 1.0 / (1.0 + jnp.exp(-x))


@functools.lru_cache(maxsize=None)
def _stencil_masks(H, W, K=7):
    """Per-tap zero-padding validity masks (flattened HW) + flat shifts."""
    pad = (K - 1) // 2
    HW = H * W
    p = np.arange(HW)
    y, x = p // W, p % W
    masks = np.zeros((K * K, HW), np.float32)
    shifts = []
    for ky in range(K):
        for kx in range(K):
            dy, dx = ky - pad, kx - pad
            shifts.append(dy * W + dx)
            ok = (x + dx >= 0) & (x + dx < W) & (y + dy >= 0) & (y + dy < H)
            masks[ky * K + kx, :] = ok.astype(np.float32)
    return masks, tuple(shifts)


def _pick_block_n(n, max_b=8):
    """Largest divisor of n that is <= max_b while keeping >= 2 grid steps."""
    if n <= 1:
        return 1
    cap = max(1, min(max_b, n // 2))
    for b in range(cap, 0, -1):
        if n % b == 0:
            return b
    return 1


def _make_camf_kernel(nb, ch, hw, mip, shifts):
    """nb samples per grid step; each sample is a (Ch, HW) slab pair."""

    def kernel(r_ref, d_ref, taps_ref, w1m_ref, w1a_ref, w2m_ref, w2a_ref,
               wfm_ref, wfa_ref, bf_ref, wc_ref, bc_ref, out_ref):
        wc = wc_ref[0]                                   # SMEM scalar
        bc = bc_ref[0]                                   # SMEM scalar
        bf = bf_ref[...]                                 # (Cout, 1)
        wfm = wfm_ref[...]                               # (Cout, Ch)
        wfa = wfa_ref[...]                               # (Cout, Ch)
        w1m = w1m_ref[...]                               # (mip, Ch)
        w1a = w1a_ref[...]                               # (mip, Ch)
        w2m = w2m_ref[...]                               # (Ch, mip)
        w2a = w2a_ref[...]                               # (Ch, mip)

        for i in range(nb):
            r = r_ref[i]                                 # (Ch, HW)
            d = d_ref[i]
            mul = r * d                                  # mul_fuse
            add = r + d                                  # add_fuse

            # --- SpatialAttention: channel-max over cat([mul, add]) -> 7x7 conv
            mx = jnp.maximum(jnp.max(mul, axis=0, keepdims=True),
                             jnp.max(add, axis=0, keepdims=True))   # (1, HW)
            conv = jnp.zeros((1, hw), jnp.float32)
            for t, s in enumerate(shifts):
                # shifted[p] == mx[p + s]; wrapped values are zeroed by the
                # edge-validity mask already folded into taps_ref.
                shifted = mx if s == 0 else pltpu.roll(mx, (-s) % hw, 1)
                conv = conv + taps_ref[pl.ds(t, 1), :] * shifted
            # sigmoid, then the 1x1 (scalar affine) conv
            sa = wc * _sigmoid(conv) + bc                            # (1, HW)

            msa = mul * sa                                           # (Ch, HW)
            asa = add * sa                                           # (Ch, HW)

            # --- ChannelAttention: adaptive max pool -> fc1 -> relu -> fc2,
            # all in column form (no transpose, no concatenate).
            pm = jnp.max(msa, axis=1, keepdims=True)                 # (Ch, 1)
            pa = jnp.max(asa, axis=1, keepdims=True)                 # (Ch, 1)
            h = jnp.maximum(
                jnp.dot(w1m, pm, preferred_element_type=jnp.float32)
                + jnp.dot(w1a, pa, preferred_element_type=jnp.float32),
                0.0)                                                 # (mip, 1)
            cav_m = jnp.dot(w2m, h, preferred_element_type=jnp.float32)  # (Ch,1)
            cav_a = jnp.dot(w2a, h, preferred_element_type=jnp.float32)  # (Ch,1)

            ca_m = msa * _sigmoid(cav_m)                             # (Ch, HW)
            ca_a = asa * _sigmoid(cav_a)                             # (Ch, HW)

            # --- fuse: 1x1 conv C -> C/2 with bias, then * sa
            fp = (jnp.dot(wfm, ca_m, preferred_element_type=jnp.float32)
                  + jnp.dot(wfa, ca_a, preferred_element_type=jnp.float32)
                  + bf)                                              # (Cout, HW)
            out_ref[i] = (fp * sa).astype(out_ref.dtype)

    return kernel


def camf_forward(r, d, params, *, block_n=None):
    """CAMF forward.  r, d: (N, Ch, H, W) with infeature = 2*Ch."""
    w_sa, w1, w2, wc, bc, wf, bf = params
    N, Ch, H, W = r.shape
    HW = H * W
    Cout = wf.shape[0]
    mip = w1.shape[0]
    K = w_sa.shape[-1]

    if block_n is None:
        block_n = _pick_block_n(N)
    assert N % block_n == 0
    grid = (N // block_n,)

    masks_np, shifts = _stencil_masks(H, W, K)
    f32 = jnp.float32
    taps = jnp.asarray(masks_np) * w_sa.astype(f32).reshape(K * K, 1)

    r2 = r.reshape(N, Ch, HW).astype(f32)
    d2 = d.reshape(N, Ch, HW).astype(f32)
    w1m = w1[:, :Ch].astype(f32)                       # (mip, Ch)
    w1a = w1[:, Ch:].astype(f32)                       # (mip, Ch)
    w2m = w2[:Ch, :].astype(f32)                       # (Ch, mip)
    w2a = w2[Ch:, :].astype(f32)                       # (Ch, mip)
    wfm = wf[:, :Ch].astype(f32)                       # (Cout, Ch)
    wfa = wf[:, Ch:].astype(f32)                       # (Cout, Ch)
    bf2 = bf.reshape(Cout, 1).astype(f32)
    wc1 = wc.reshape(1).astype(f32)
    bc1 = bc.reshape(1).astype(f32)

    kernel = _make_camf_kernel(block_n, Ch, HW, mip, shifts)

    out = pl.pallas_call(
        kernel,
        out_shape=jax.ShapeDtypeStruct((N, Cout, HW), f32),
        grid=grid,
        in_specs=[
            pl.BlockSpec((block_n, Ch, HW), lambda n: (n, 0, 0)),   # r
            pl.BlockSpec((block_n, Ch, HW), lambda n: (n, 0, 0)),   # d
            pl.BlockSpec((K * K, HW), lambda n: (0, 0)),            # conv taps
            pl.BlockSpec((mip, Ch), lambda n: (0, 0)),              # w1 (mul half)
            pl.BlockSpec((mip, Ch), lambda n: (0, 0)),              # w1 (add half)
            pl.BlockSpec((Ch, mip), lambda n: (0, 0)),              # w2 (mul half)
            pl.BlockSpec((Ch, mip), lambda n: (0, 0)),              # w2 (add half)
            pl.BlockSpec((Cout, Ch), lambda n: (0, 0)),             # fuse w (mul half)
            pl.BlockSpec((Cout, Ch), lambda n: (0, 0)),             # fuse w (add half)
            pl.BlockSpec((Cout, 1), lambda n: (0, 0)),              # fuse bias
            pl.BlockSpec(memory_space=pltpu.MemorySpace.SMEM),      # wc (scalar)
            pl.BlockSpec(memory_space=pltpu.MemorySpace.SMEM),      # bc (scalar)
        ],
        out_specs=pl.BlockSpec((block_n, Cout, HW), lambda n: (n, 0, 0)),
        compiler_params=pltpu.CompilerParams(
            dimension_semantics=("parallel",)),
    )(r2, d2, taps, w1m, w1a, w2m, w2a, wfm, wfa, bf2, wc1, bc1)
    return out.reshape(N, Cout, H, W)


def camf_reference(r, d, params):
    """Pure-JAX NCHW reference mirroring the PyTorch forward (for validation)."""
    w_sa, w1, w2, wc, bc, wf, bf = params
    mul = r * d
    add = r + d
    all_fuse = jnp.concatenate([mul, add], axis=1)                  # (N, C, H, W)
    mx = jnp.max(all_fuse, axis=1, keepdims=True)                   # (N, 1, H, W)
    conv = jax.lax.conv_general_dilated(
        mx, w_sa, window_strides=(1, 1), padding=((3, 3), (3, 3)),
        dimension_numbers=('NCHW', 'OIHW', 'NCHW'))
    sa = _sigmoid(conv)
    sa = wc.reshape(()) * sa + bc.reshape(())                       # 1x1 conv (bias)
    x = all_fuse * sa
    pooled = jnp.max(x, axis=(2, 3), keepdims=True)                 # (N, C, 1, 1)
    h = jnp.maximum(jnp.einsum('oc,nchw->nohw', w1, pooled), 0.0)
    cav = jnp.einsum('oc,nchw->nohw', w2, h)
    ca = x * _sigmoid(cav)
    fuse = jnp.einsum('oc,nchw->nohw', wf, ca) + bf[None, :, None, None]
    return fuse * sa


if __name__ == "__main__":
    # r/d have 16 channels each -> infeature = 32, mip = min(8, 32 // 16) = 2
    N, Ch, H, W = 2, 16, 16, 16
    C = 2 * Ch
    mip = min(8, C // 16)
    Cout = C // 2

    key = jax.random.PRNGKey(0)
    ks = jax.random.split(key, 9)
    r = jax.random.normal(ks[0], (N, Ch, H, W), jnp.float32)
    d = jax.random.normal(ks[1], (N, Ch, H, W), jnp.float32)

    w_sa = 0.1 * jax.random.normal(ks[2], (1, 1, 7, 7), jnp.float32)  # SA conv (no bias)
    w1 = 0.3 * jax.random.normal(ks[3], (mip, C), jnp.float32)        # CA fc1 (no bias)
    w2 = 0.3 * jax.random.normal(ks[4], (C, mip), jnp.float32)        # CA fc2 (no bias)
    wc = 0.5 * jax.random.normal(ks[5], (1,), jnp.float32) + 1.0      # 1x1 conv weight
    bc = 0.1 * jax.random.normal(ks[6], (1,), jnp.float32)            # 1x1 conv bias
    wf = 0.2 * jax.random.normal(ks[7], (Cout, C), jnp.float32)       # fuse weight
    bf = 0.1 * jax.random.normal(ks[8], (Cout,), jnp.float32)         # fuse bias
    params = (w_sa, w1, w2, wc, bc, wf, bf)

    fwd = jax.jit(camf_forward)
    out = jax.block_until_ready(fwd(r, d, params))

    ref = camf_reference(r, d, params)
    np.testing.assert_allclose(np.asarray(out), np.asarray(ref),
                               rtol=1e-4, atol=1e-4)
    print("KERNEL_OK")
</pallas_src>

<mosaic_0001>
module attributes {stable_mosaic.version = 11 : i64} {
  func.func @kernel(%arg0: i32, %arg1: memref<1x16x256xf32, #tpu.memory_space<vmem>>, %arg2: memref<1x16x256xf32, #tpu.memory_space<vmem>>, %arg3: memref<49x256xf32, #tpu.memory_space<vmem>>, %arg4: memref<2x16xf32, #tpu.memory_space<vmem>>, %arg5: memref<2x16xf32, #tpu.memory_space<vmem>>, %arg6: memref<16x2xf32, #tpu.memory_space<vmem>>, %arg7: memref<16x2xf32, #tpu.memory_space<vmem>>, %arg8: memref<16x16xf32, #tpu.memory_space<vmem>>, %arg9: memref<16x16xf32, #tpu.memory_space<vmem>>, %arg10: memref<16x1xf32, #tpu.memory_space<vmem>>, %arg11: memref<1xf32, #tpu.memory_space<smem>>, %arg12: memref<1xf32, #tpu.memory_space<smem>>, %arg13: memref<1x16x256xf32, #tpu.memory_space<vmem>>) attributes {dimension_semantics = [#tpu.dimension_semantics<parallel>], iteration_bounds = array<i64: 2>, scalar_prefetch = 0 : i64, scratch_operands = 0 : i64, tpu.core_type = #tpu.core_type<tc>, window_params = [{transform_indices = @transform_0, window_bounds = array<i64: 1, 16, 256>}, {transform_indices = @transform_1, window_bounds = array<i64: 1, 16, 256>}, {pipeline_mode = #tpu.pipeline_mode<synchronous>, transform_indices = @transform_2, window_bounds = array<i64: 49, 256>}, {pipeline_mode = #tpu.pipeline_mode<synchronous>, transform_indices = @transform_3, window_bounds = array<i64: 2, 16>}, {pipeline_mode = #tpu.pipeline_mode<synchronous>, transform_indices = @transform_4, window_bounds = array<i64: 2, 16>}, {pipeline_mode = #tpu.pipeline_mode<synchronous>, transform_indices = @transform_5, window_bounds = array<i64: 16, 2>}, {pipeline_mode = #tpu.pipeline_mode<synchronous>, transform_indices = @transform_6, window_bounds = array<i64: 16, 2>}, {pipeline_mode = #tpu.pipeline_mode<synchronous>, transform_indices = @transform_7, window_bounds = array<i64: 16, 16>}, {pipeline_mode = #tpu.pipeline_mode<synchronous>, transform_indices = @transform_8, window_bounds = array<i64: 16, 16>}, {pipeline_mode = #tpu.pipeline_mode<synchronous>, transform_indices = @transform_9, window_bounds = array<i64: 16, 1>}, {transform_indices = @transform_10, window_bounds = array<i64: 1>}, {transform_indices = @transform_11, window_bounds = array<i64: 1>}, {transform_indices = @transform_12, window_bounds = array<i64: 1, 16, 256>}]} {
    %c0 = arith.constant 0 : index
    %0 = memref.load %arg11[%c0] : memref<1xf32, #tpu.memory_space<smem>>
    %c0_0 = arith.constant 0 : index
    %1 = memref.load %arg12[%c0_0] : memref<1xf32, #tpu.memory_space<smem>>
    %c0_1 = arith.constant 0 : index
    %c0_2 = arith.constant 0 : index
    %2 = vector.load %arg10[%c0_1, %c0_2] : memref<16x1xf32, #tpu.memory_space<vmem>>, vector<16x1xf32>
    %c0_3 = arith.constant 0 : index
    %c0_4 = arith.constant 0 : index
    %3 = vector.load %arg8[%c0_3, %c0_4] : memref<16x16xf32, #tpu.memory_space<vmem>>, vector<16x16xf32>
    %c0_5 = arith.constant 0 : index
    %c0_6 = arith.constant 0 : index
    %4 = vector.load %arg9[%c0_5, %c0_6] : memref<16x16xf32, #tpu.memory_space<vmem>>, vector<16x16xf32>
    %c0_7 = arith.constant 0 : index
    %c0_8 = arith.constant 0 : index
    %5 = vector.load %arg4[%c0_7, %c0_8] : memref<2x16xf32, #tpu.memory_space<vmem>>, vector<2x16xf32>
    %c0_9 = arith.constant 0 : index
    %c0_10 = arith.constant 0 : index
    %6 = vector.load %arg5[%c0_9, %c0_10] : memref<2x16xf32, #tpu.memory_space<vmem>>, vector<2x16xf32>
    %c0_11 = arith.constant 0 : index
    %c0_12 = arith.constant 0 : index
    %7 = vector.load %arg6[%c0_11, %c0_12] : memref<16x2xf32, #tpu.memory_space<vmem>>, vector<16x2xf32>
    %c0_13 = arith.constant 0 : index
    %c0_14 = arith.constant 0 : index
    %8 = vector.load %arg7[%c0_13, %c0_14] : memref<16x2xf32, #tpu.memory_space<vmem>>, vector<16x2xf32>
    %c0_15 = arith.constant 0 : index
    %c0_16 = arith.constant 0 : index
    %c0_17 = arith.constant 0 : index
    %9 = vector.load %arg1[%c0_15, %c0_16, %c0_17] : memref<1x16x256xf32, #tpu.memory_space<vmem>>, vector<1x16x256xf32>
    %10 = vector.shape_cast %9 : vector<1x16x256xf32> to vector<16x256xf32>
    %c0_18 = arith.constant 0 : index
    %c0_19 = arith.constant 0 : index
    %c0_20 = arith.constant 0 : index
    %11 = vector.load %arg2[%c0_18, %c0_19, %c0_20] : memref<1x16x256xf32, #tpu.memory_space<vmem>>, vector<1x16x256xf32>
    %12 = vector.shape_cast %11 : vector<1x16x256xf32> to vector<16x256xf32>
    %13 = arith.mulf %10, %12 : vector<16x256xf32>
    %14 = arith.addf %10, %12 : vector<16x256xf32>
    %cst = arith.constant dense<0xFF800000> : vector<256xf32>
    %15 = vector.multi_reduction <maximumf>, %13, %cst [0] : vector<16x256xf32> to vector<256xf32>
    %16 = vector.shape_cast %15 : vector<256xf32> to vector<1x256xf32>
    %cst_21 = arith.constant dense<0xFF800000> : vector<256xf32>
    %17 = vector.multi_reduction <maximumf>, %14, %cst_21 [0] : vector<16x256xf32> to vector<256xf32>
    %18 = vector.shape_cast %17 : vector<256xf32> to vector<1x256xf32>
    %19 = arith.maximumf %16, %18 : vector<1x256xf32>
    %cst_22 = arith.constant 0.000000e+00 : f32
    %20 = vector.broadcast %cst_22 : f32 to vector<1x256xf32>
    %c51_i32 = arith.constant 51 : i32
    %21 = tpu.dynamic_rotate %19 by %c51_i32 dim 1 : vector<1x256xf32>, i32 -> vector<1x256xf32>
    %c0_23 = arith.constant 0 : index
    %c0_24 = arith.constant 0 : index
    %22 = vector.load %arg3[%c0_23, %c0_24] : memref<49x256xf32, #tpu.memory_space<vmem>>, vector<1x256xf32>
    %23 = arith.mulf %22, %21 : vector<1x256xf32>
    %24 = arith.addf %20, %23 : vector<1x256xf32>
    %c50_i32 = arith.constant 50 : i32
    %25 = tpu.dynamic_rotate %19 by %c50_i32 dim 1 : vector<1x256xf32>, i32 -> vector<1x256xf32>
    %c1 = arith.constant 1 : index
    %c0_25 = arith.constant 0 : index
    %26 = vector.load %arg3[%c1, %c0_25] : memref<49x256xf32, #tpu.memory_space<vmem>>, vector<1x256xf32>
    %27 = arith.mulf %26, %25 : vector<1x256xf32>
    %28 = arith.addf %24, %27 : vector<1x256xf32>
    %c49_i32 = arith.constant 49 : i32
    %29 = tpu.dynamic_rotate %19 by %c49_i32 dim 1 : vector<1x256xf32>, i32 -> vector<1x256xf32>
    %c2 = arith.constant 2 : index
    %c0_26 = arith.constant 0 : index
    %30 = vector.load %arg3[%c2, %c0_26] : memref<49x256xf32, #tpu.memory_space<vmem>>, vector<1x256xf32>
    %31 = arith.mulf %30, %29 : vector<1x256xf32>
    %32 = arith.addf %28, %31 : vector<1x256xf32>
    %c48_i32 = arith.constant 48 : i32
    %33 = tpu.dynamic_rotate %19 by %c48_i32 dim 1 : vector<1x256xf32>, i32 -> vector<1x256xf32>
    %c3 = arith.constant 3 : index
    %c0_27 = arith.constant 0 : index
    %34 = vector.load %arg3[%c3, %c0_27] : memref<49x256xf32, #tpu.memory_space<vmem>>, vector<1x256xf32>
    %35 = arith.mulf %34, %33 : vector<1x256xf32>
    %36 = arith.addf %32, %35 : vector<1x256xf32>
    %c47_i32 = arith.constant 47 : i32
    %37 = tpu.dynamic_rotate %19 by %c47_i32 dim 1 : vector<1x256xf32>, i32 -> vector<1x256xf32>
    %c4 = arith.constant 4 : index
    %c0_28 = arith.constant 0 : index
    %38 = vector.load %arg3[%c4, %c0_28] : memref<49x256xf32, #tpu.memory_space<vmem>>, vector<1x256xf32>
    %39 = arith.mulf %38, %37 : vector<1x256xf32>
    %40 = arith.addf %36, %39 : vector<1x256xf32>
    %c46_i32 = arith.constant 46 : i32
    %41 = tpu.dynamic_rotate %19 by %c46_i32 dim 1 : vector<1x256xf32>, i32 -> vector<1x256xf32>
    %c5 = arith.constant 5 : index
    %c0_29 = arith.constant 0 : index
    %42 = vector.load %arg3[%c5, %c0_29] : memref<49x256xf32, #tpu.memory_space<vmem>>, vector<1x256xf32>
    %43 = arith.mulf %42, %41 : vector<1x256xf32>
    %44 = arith.addf %40, %43 : vector<1x256xf32>
    %c45_i32 = arith.constant 45 : i32
    %45 = tpu.dynamic_rotate %19 by %c45_i32 dim 1 : vector<1x256xf32>, i32 -> vector<1x256xf32>
    %c6 = arith.constant 6 : index
    %c0_30 = arith.constant 0 : index
    %46 = vector.load %arg3[%c6, %c0_30] : memref<49x256xf32, #tpu.memory_space<vmem>>, vector<1x256xf32>
    %47 = arith.mulf %46, %45 : vector<1x256xf32>
    %48 = arith.addf %44, %47 : vector<1x256xf32>
    %c35_i32 = arith.constant 35 : i32
    %49 = tpu.dynamic_rotate %19 by %c35_i32 dim 1 : vector<1x256xf32>, i32 -> vector<1x256xf32>
    %c7 = arith.constant 7 : index
    %c0_31 = arith.constant 0 : index
    %50 = vector.load %arg3[%c7, %c0_31] : memref<49x256xf32, #tpu.memory_space<vmem>>, vector<1x256xf32>
    %51 = arith.mulf %50, %49 : vector<1x256xf32>
    %52 = arith.addf %48, %51 : vector<1x256xf32>
    %c34_i32 = arith.constant 34 : i32
    %53 = tpu.dynamic_rotate %19 by %c34_i32 dim 1 : vector<1x256xf32>, i32 -> vector<1x256xf32>
    %c8 = arith.constant 8 : index
    %c0_32 = arith.constant 0 : index
    %54 = vector.load %arg3[%c8, %c0_32] : memref<49x256xf32, #tpu.memory_space<vmem>>, vector<1x256xf32>
    %55 = arith.mulf %54, %53 : vector<1x256xf32>
    %56 = arith.addf %52, %55 : vector<1x256xf32>
    %c33_i32 = arith.constant 33 : i32
    %57 = tpu.dynamic_rotate %19 by %c33_i32 dim 1 : vector<1x256xf32>, i32 -> vector<1x256xf32>
    %c9 = arith.constant 9 : index
    %c0_33 = arith.constant 0 : index
    %58 = vector.load %arg3[%c9, %c0_33] : memref<49x256xf32, #tpu.memory_space<vmem>>, vector<1x256xf32>
    %59 = arith.mulf %58, %57 : vector<1x256xf32>
    %60 = arith.addf %56, %59 : vector<1x256xf32>
    %c32_i32 = arith.constant 32 : i32
    %61 = tpu.dynamic_rotate %19 by %c32_i32 dim 1 : vector<1x256xf32>, i32 -> vector<1x256xf32>
    %c10 = arith.constant 10 : index
    %c0_34 = arith.constant 0 : index
    %62 = vector.load %arg3[%c10, %c0_34] : memref<49x256xf32, #tpu.memory_space<vmem>>, vector<1x256xf32>
    %63 = arith.mulf %62, %61 : vector<1x256xf32>
    %64 = arith.addf %60, %63 : vector<1x256xf32>
    %c31_i32 = arith.constant 31 : i32
    %65 = tpu.dynamic_rotate %19 by %c31_i32 dim 1 : vector<1x256xf32>, i32 -> vector<1x256xf32>
    %c11 = arith.constant 11 : index
    %c0_35 = arith.constant 0 : index
    %66 = vector.load %arg3[%c11, %c0_35] : memref<49x256xf32, #tpu.memory_space<vmem>>, vector<1x256xf32>
    %67 = arith.mulf %66, %65 : vector<1x256xf32>
    %68 = arith.addf %64, %67 : vector<1x256xf32>
    %c30_i32 = arith.constant 30 : i32
    %69 = tpu.dynamic_rotate %19 by %c30_i32 dim 1 : vector<1x256xf32>, i32 -> vector<1x256xf32>
    %c12 = arith.constant 12 : index
    %c0_36 = arith.constant 0 : index
    %70 = vector.load %arg3[%c12, %c0_36] : memref<49x256xf32, #tpu.memory_space<vmem>>, vector<1x256xf32>
    %71 = arith.mulf %70, %69 : vector<1x256xf32>
    %72 = arith.addf %68, %71 : vector<1x256xf32>
    %c29_i32 = arith.constant 29 : i32
    %73 = tpu.dynamic_rotate %19 by %c29_i32 dim 1 : vector<1x256xf32>, i32 -> vector<1x256xf32>
    %c13 = arith.constant 13 : index
    %c0_37 = arith.constant 0 : index
    %74 = vector.load %arg3[%c13, %c0_37] : memref<49x256xf32, #tpu.memory_space<vmem>>, vector<1x256xf32>
    %75 = arith.mulf %74, %73 : vector<1x256xf32>
    %76 = arith.addf %72, %75 : vector<1x256xf32>
    %c19_i32 = arith.constant 19 : i32
    %77 = tpu.dynamic_rotate %19 by %c19_i32 dim 1 : vector<1x256xf32>, i32 -> vector<1x256xf32>
    %c14 = arith.constant 14 : index
    %c0_38 = arith.constant 0 : index
    %78 = vector.load %arg3[%c14, %c0_38] : memref<49x256xf32, #tpu.memory_space<vmem>>, vector<1x256xf32>
    %79 = arith.mulf %78, %77 : vector<1x256xf32>
    %80 = arith.addf %76, %79 : vector<1x256xf32>
    %c18_i32 = arith.constant 18 : i32
    %81 = tpu.dynamic_rotate %19 by %c18_i32 dim 1 : vector<1x256xf32>, i32 -> vector<1x256xf32>
    %c15 = arith.constant 15 : index
    %c0_39 = arith.constant 0 : index
    %82 = vector.load %arg3[%c15, %c0_39] : memref<49x256xf32, #tpu.memory_space<vmem>>, vector<1x256xf32>
    %83 = arith.mulf %82, %81 : vector<1x256xf32>
    %84 = arith.addf %80, %83 : vector<1x256xf32>
    %c17_i32 = arith.constant 17 : i32
    %85 = tpu.dynamic_rotate %19 by %c17_i32 dim 1 : vector<1x256xf32>, i32 -> vector<1x256xf32>
    %c16 = arith.constant 16 : index
    %c0_40 = arith.constant 0 : index
    %86 = vector.load %arg3[%c16, %c0_40] : memref<49x256xf32, #tpu.memory_space<vmem>>, vector<1x256xf32>
    %87 = arith.mulf %86, %85 : vector<1x256xf32>
    %88 = arith.addf %84, %87 : vector<1x256xf32>
    %c16_i32 = arith.constant 16 : i32
    %89 = tpu.dynamic_rotate %19 by %c16_i32 dim 1 : vector<1x256xf32>, i32 -> vector<1x256xf32>
    %c17 = arith.constant 17 : index
    %c0_41 = arith.constant 0 : index
    %90 = vector.load %arg3[%c17, %c0_41] : memref<49x256xf32, #tpu.memory_space<vmem>>, vector<1x256xf32>
    %91 = arith.mulf %90, %89 : vector<1x256xf32>
    %92 = arith.addf %88, %91 : vector<1x256xf32>
    %c15_i32 = arith.constant 15 : i32
    %93 = tpu.dynamic_rotate %19 by %c15_i32 dim 1 : vector<1x256xf32>, i32 -> vector<1x256xf32>
    %c18 = arith.constant 18 : index
    %c0_42 = arith.constant 0 : index
    %94 = vector.load %arg3[%c18, %c0_42] : memref<49x256xf32, #tpu.memory_space<vmem>>, vector<1x256xf32>
    %95 = arith.mulf %94, %93 : vector<1x256xf32>
    %96 = arith.addf %92, %95 : vector<1x256xf32>
    %c14_i32 = arith.constant 14 : i32
    %97 = tpu.dynamic_rotate %19 by %c14_i32 dim 1 : vector<1x256xf32>, i32 -> vector<1x256xf32>
    %c19 = arith.constant 19 : index
    %c0_43 = arith.constant 0 : index
    %98 = vector.load %arg3[%c19, %c0_43] : memref<49x256xf32, #tpu.memory_space<vmem>>, vector<1x256xf32>
    %99 = arith.mulf %98, %97 : vector<1x256xf32>
    %100 = arith.addf %96, %99 : vector<1x256xf32>
    %c13_i32 = arith.constant 13 : i32
    %101 = tpu.dynamic_rotate %19 by %c13_i32 dim 1 : vector<1x256xf32>, i32 -> vector<1x256xf32>
    %c20 = arith.constant 20 : index
    %c0_44 = arith.constant 0 : index
    %102 = vector.load %arg3[%c20, %c0_44] : memref<49x256xf32, #tpu.memory_space<vmem>>, vector<1x256xf32>
    %103 = arith.mulf %102, %101 : vector<1x256xf32>
    %104 = arith.addf %100, %103 : vector<1x256xf32>
    %c3_i32 = arith.constant 3 : i32
    %105 = tpu.dynamic_rotate %19 by %c3_i32 dim 1 : vector<1x256xf32>, i32 -> vector<1x256xf32>
    %c21 = arith.constant 21 : index
    %c0_45 = arith.constant 0 : index
    %106 = vector.load %arg3[%c21, %c0_45] : memref<49x256xf32, #tpu.memory_space<vmem>>, vector<1x256xf32>
    %107 = arith.mulf %106, %105 : vector<1x256xf32>
    %108 = arith.addf %104, %107 : vector<1x256xf32>
    %c2_i32 = arith.constant 2 : i32
    %109 = tpu.dynamic_rotate %19 by %c2_i32 dim 1 : vector<1x256xf32>, i32 -> vector<1x256xf32>
    %c22 = arith.constant 22 : index
    %c0_46 = arith.constant 0 : index
    %110 = vector.load %arg3[%c22, %c0_46] : memref<49x256xf32, #tpu.memory_space<vmem>>, vector<1x256xf32>
    %111 = arith.mulf %110, %109 : vector<1x256xf32>
    %112 = arith.addf %108, %111 : vector<1x256xf32>
    %c1_i32 = arith.constant 1 : i32
    %113 = tpu.dynamic_rotate %19 by %c1_i32 dim 1 : vector<1x256xf32>, i32 -> vector<1x256xf32>
    %c23 = arith.constant 23 : index
    %c0_47 = arith.constant 0 : index
    %114 = vector.load %arg3[%c23, %c0_47] : memref<49x256xf32, #tpu.memory_space<vmem>>, vector<1x256xf32>
    %115 = arith.mulf %114, %113 : vector<1x256xf32>
    %116 = arith.addf %112, %115 : vector<1x256xf32>
    %c24 = arith.constant 24 : index
    %c0_48 = arith.constant 0 : index
    %117 = vector.load %arg3[%c24, %c0_48] : memref<49x256xf32, #tpu.memory_space<vmem>>, vector<1x256xf32>
    %118 = arith.mulf %117, %19 : vector<1x256xf32>
    %119 = arith.addf %116, %118 : vector<1x256xf32>
    %c255_i32 = arith.constant 255 : i32
    %120 = tpu.dynamic_rotate %19 by %c255_i32 dim 1 : vector<1x256xf32>, i32 -> vector<1x256xf32>
    %c25 = arith.constant 25 : index
    %c0_49 = arith.constant 0 : index
    %121 = vector.load %arg3[%c25, %c0_49] : memref<49x256xf32, #tpu.memory_space<vmem>>, vector<1x256xf32>
    %122 = arith.mulf %121, %120 : vector<1x256xf32>
    %123 = arith.addf %119, %122 : vector<1x256xf32>
    %c254_i32 = arith.constant 254 : i32
    %124 = tpu.dynamic_rotate %19 by %c254_i32 dim 1 : vector<1x256xf32>, i32 -> vector<1x256xf32>
    %c26 = arith.constant 26 : index
    %c0_50 = arith.constant 0 : index
    %125 = vector.load %arg3[%c26, %c0_50] : memref<49x256xf32, #tpu.memory_space<vmem>>, vector<1x256xf32>
    %126 = arith.mulf %125, %124 : vector<1x256xf32>
    %127 = arith.addf %123, %126 : vector<1x256xf32>
    %c253_i32 = arith.constant 253 : i32
    %128 = tpu.dynamic_rotate %19 by %c253_i32 dim 1 : vector<1x256xf32>, i32 -> vector<1x256xf32>
    %c27 = arith.constant 27 : index
    %c0_51 = arith.constant 0 : index
    %129 = vector.load %arg3[%c27, %c0_51] : memref<49x256xf32, #tpu.memory_space<vmem>>, vector<1x256xf32>
    %130 = arith.mulf %129, %128 : vector<1x256xf32>
    %131 = arith.addf %127, %130 : vector<1x256xf32>
    %c243_i32 = arith.constant 243 : i32
    %132 = tpu.dynamic_rotate %19 by %c243_i32 dim 1 : vector<1x256xf32>, i32 -> vector<1x256xf32>
    %c28 = arith.constant 28 : index
    %c0_52 = arith.constant 0 : index
    %133 = vector.load %arg3[%c28, %c0_52] : memref<49x256xf32, #tpu.memory_space<vmem>>, vector<1x256xf32>
    %134 = arith.mulf %133, %132 : vector<1x256xf32>
    %135 = arith.addf %131, %134 : vector<1x256xf32>
    %c242_i32 = arith.constant 242 : i32
    %136 = tpu.dynamic_rotate %19 by %c242_i32 dim 1 : vector<1x256xf32>, i32 -> vector<1x256xf32>
    %c29 = arith.constant 29 : index
    %c0_53 = arith.constant 0 : index
    %137 = vector.load %arg3[%c29, %c0_53] : memref<49x256xf32, #tpu.memory_space<vmem>>, vector<1x256xf32>
    %138 = arith.mulf %137, %136 : vector<1x256xf32>
    %139 = arith.addf %135, %138 : vector<1x256xf32>
    %c241_i32 = arith.constant 241 : i32
    %140 = tpu.dynamic_rotate %19 by %c241_i32 dim 1 : vector<1x256xf32>, i32 -> vector<1x256xf32>
    %c30 = arith.constant 30 : index
    %c0_54 = arith.constant 0 : index
    %141 = vector.load %arg3[%c30, %c0_54] : memref<49x256xf32, #tpu.memory_space<vmem>>, vector<1x256xf32>
    %142 = arith.mulf %141, %140 : vector<1x256xf32>
    %143 = arith.addf %139, %142 : vector<1x256xf32>
    %c240_i32 = arith.constant 240 : i32
    %144 = tpu.dynamic_rotate %19 by %c240_i32 dim 1 : vector<1x256xf32>, i32 -> vector<1x256xf32>
    %c31 = arith.constant 31 : index
    %c0_55 = arith.constant 0 : index
    %145 = vector.load %arg3[%c31, %c0_55] : memref<49x256xf32, #tpu.memory_space<vmem>>, vector<1x256xf32>
    %146 = arith.mulf %145, %144 : vector<1x256xf32>
    %147 = arith.addf %143, %146 : vector<1x256xf32>
    %c239_i32 = arith.constant 239 : i32
    %148 = tpu.dynamic_rotate %19 by %c239_i32 dim 1 : vector<1x256xf32>, i32 -> vector<1x256xf32>
    %c32 = arith.constant 32 : index
    %c0_56 = arith.constant 0 : index
    %149 = vector.load %arg3[%c32, %c0_56] : memref<49x256xf32, #tpu.memory_space<vmem>>, vector<1x256xf32>
    %150 = arith.mulf %149, %148 : vector<1x256xf32>
    %151 = arith.addf %147, %150 : vector<1x256xf32>
    %c238_i32 = arith.constant 238 : i32
    %152 = tpu.dynamic_rotate %19 by %c238_i32 dim 1 : vector<1x256xf32>, i32 -> vector<1x256xf32>
    %c33 = arith.constant 33 : index
    %c0_57 = arith.constant 0 : index
    %153 = vector.load %arg3[%c33, %c0_57] : memref<49x256xf32, #tpu.memory_space<vmem>>, vector<1x256xf32>
    %154 = arith.mulf %153, %152 : vector<1x256xf32>
    %155 = arith.addf %151, %154 : vector<1x256xf32>
    %c237_i32 = arith.constant 237 : i32
    %156 = tpu.dynamic_rotate %19 by %c237_i32 dim 1 : vector<1x256xf32>, i32 -> vector<1x256xf32>
    %c34 = arith.constant 34 : index
    %c0_58 = arith.constant 0 : index
    %157 = vector.load %arg3[%c34, %c0_58] : memref<49x256xf32, #tpu.memory_space<vmem>>, vector<1x256xf32>
    %158 = arith.mulf %157, %156 : vector<1x256xf32>
    %159 = arith.addf %155, %158 : vector<1x256xf32>
    %c227_i32 = arith.constant 227 : i32
    %160 = tpu.dynamic_rotate %19 by %c227_i32 dim 1 : vector<1x256xf32>, i32 -> vector<1x256xf32>
    %c35 = arith.constant 35 : index
    %c0_59 = arith.constant 0 : index
    %161 = vector.load %arg3[%c35, %c0_59] : memref<49x256xf32, #tpu.memory_space<vmem>>, vector<1x256xf32>
    %162 = arith.mulf %161, %160 : vector<1x256xf32>
    %163 = arith.addf %159, %162 : vector<1x256xf32>
    %c226_i32 = arith.constant 226 : i32
    %164 = tpu.dynamic_rotate %19 by %c226_i32 dim 1 : vector<1x256xf32>, i32 -> vector<1x256xf32>
    %c36 = arith.constant 36 : index
    %c0_60 = arith.constant 0 : index
    %165 = vector.load %arg3[%c36, %c0_60] : memref<49x256xf32, #tpu.memory_space<vmem>>, vector<1x256xf32>
    %166 = arith.mulf %165, %164 : vector<1x256xf32>
    %167 = arith.addf %163, %166 : vector<1x256xf32>
    %c225_i32 = arith.constant 225 : i32
    %168 = tpu.dynamic_rotate %19 by %c225_i32 dim 1 : vector<1x256xf32>, i32 -> vector<1x256xf32>
    %c37 = arith.constant 37 : index
    %c0_61 = arith.constant 0 : index
    %169 = vector.load %arg3[%c37, %c0_61] : memref<49x256xf32, #tpu.memory_space<vmem>>, vector<1x256xf32>
    %170 = arith.mulf %169, %168 : vector<1x256xf32>
    %171 = arith.addf %167, %170 : vector<1x256xf32>
    %c224_i32 = arith.constant 224 : i32
    %172 = tpu.dynamic_rotate %19 by %c224_i32 dim 1 : vector<1x256xf32>, i32 -> vector<1x256xf32>
    %c38 = arith.constant 38 : index
    %c0_62 = arith.constant 0 : index
    %173 = vector.load %arg3[%c38, %c0_62] : memref<49x256xf32, #tpu.memory_space<vmem>>, vector<1x256xf32>
    %174 = arith.mulf %173, %172 : vector<1x256xf32>
    %175 = arith.addf %171, %174 : vector<1x256xf32>
    %c223_i32 = arith.constant 223 : i32
    %176 = tpu.dynamic_rotate %19 by %c223_i32 dim 1 : vector<1x256xf32>, i32 -> vector<1x256xf32>
    %c39 = arith.constant 39 : index
    %c0_63 = arith.constant 0 : index
    %177 = vector.load %arg3[%c39, %c0_63] : memref<49x256xf32, #tpu.memory_space<vmem>>, vector<1x256xf32>
    %178 = arith.mulf %177, %176 : vector<1x256xf32>
    %179 = arith.addf %175, %178 : vector<1x256xf32>
    %c222_i32 = arith.constant 222 : i32
    %180 = tpu.dynamic_rotate %19 by %c222_i32 dim 1 : vector<1x256xf32>, i32 -> vector<1x256xf32>
    %c40 = arith.constant 40 : index
    %c0_64 = arith.constant 0 : index
    %181 = vector.load %arg3[%c40, %c0_64] : memref<49x256xf32, #tpu.memory_space<vmem>>, vector<1x256xf32>
    %182 = arith.mulf %181, %180 : vector<1x256xf32>
    %183 = arith.addf %179, %182 : vector<1x256xf32>
    %c221_i32 = arith.constant 221 : i32
    %184 = tpu.dynamic_rotate %19 by %c221_i32 dim 1 : vector<1x256xf32>, i32 -> vector<1x256xf32>
    %c41 = arith.constant 41 : index
    %c0_65 = arith.constant 0 : index
    %185 = vector.load %arg3[%c41, %c0_65] : memref<49x256xf32, #tpu.memory_space<vmem>>, vector<1x256xf32>
    %186 = arith.mulf %185, %184 : vector<1x256xf32>
    %187 = arith.addf %183, %186 : vector<1x256xf32>
    %c211_i32 = arith.constant 211 : i32
    %188 = tpu.dynamic_rotate %19 by %c211_i32 dim 1 : vector<1x256xf32>, i32 -> vector<1x256xf32>
    %c42 = arith.constant 42 : index
    %c0_66 = arith.constant 0 : index
    %189 = vector.load %arg3[%c42, %c0_66] : memref<49x256xf32, #tpu.memory_space<vmem>>, vector<1x256xf32>
    %190 = arith.mulf %189, %188 : vector<1x256xf32>
    %191 = arith.addf %187, %190 : vector<1x256xf32>
    %c210_i32 = arith.constant 210 : i32
    %192 = tpu.dynamic_rotate %19 by %c210_i32 dim 1 : vector<1x256xf32>, i32 -> vector<1x256xf32>
    %c43 = arith.constant 43 : index
    %c0_67 = arith.constant 0 : index
    %193 = vector.load %arg3[%c43, %c0_67] : memref<49x256xf32, #tpu.memory_space<vmem>>, vector<1x256xf32>
    %194 = arith.mulf %193, %192 : vector<1x256xf32>
    %195 = arith.addf %191, %194 : vector<1x256xf32>
    %c209_i32 = arith.constant 209 : i32
    %196 = tpu.dynamic_rotate %19 by %c209_i32 dim 1 : vector<1x256xf32>, i32 -> vector<1x256xf32>
    %c44 = arith.constant 44 : index
    %c0_68 = arith.constant 0 : index
    %197 = vector.load %arg3[%c44, %c0_68] : memref<49x256xf32, #tpu.memory_space<vmem>>, vector<1x256xf32>
    %198 = arith.mulf %197, %196 : vector<1x256xf32>
    %199 = arith.addf %195, %198 : vector<1x256xf32>
    %c208_i32 = arith.constant 208 : i32
    %200 = tpu.dynamic_rotate %19 by %c208_i32 dim 1 : vector<1x256xf32>, i32 -> vector<1x256xf32>
    %c45 = arith.constant 45 : index
    %c0_69 = arith.constant 0 : index
    %201 = vector.load %arg3[%c45, %c0_69] : memref<49x256xf32, #tpu.memory_space<vmem>>, vector<1x256xf32>
    %202 = arith.mulf %201, %200 : vector<1x256xf32>
    %203 = arith.addf %199, %202 : vector<1x256xf32>
    %c207_i32 = arith.constant 207 : i32
    %204 = tpu.dynamic_rotate %19 by %c207_i32 dim 1 : vector<1x256xf32>, i32 -> vector<1x256xf32>
    %c46 = arith.constant 46 : index
    %c0_70 = arith.constant 0 : index
    %205 = vector.load %arg3[%c46, %c0_70] : memref<49x256xf32, #tpu.memory_space<vmem>>, vector<1x256xf32>
    %206 = arith.mulf %205, %204 : vector<1x256xf32>
    %207 = arith.addf %203, %206 : vector<1x256xf32>
    %c206_i32 = arith.constant 206 : i32
    %208 = tpu.dynamic_rotate %19 by %c206_i32 dim 1 : vector<1x256xf32>, i32 -> vector<1x256xf32>
    %c47 = arith.constant 47 : index
    %c0_71 = arith.constant 0 : index
    %209 = vector.load %arg3[%c47, %c0_71] : memref<49x256xf32, #tpu.memory_space<vmem>>, vector<1x256xf32>
    %210 = arith.mulf %209, %208 : vector<1x256xf32>
    %211 = arith.addf %207, %210 : vector<1x256xf32>
    %c205_i32 = arith.constant 205 : i32
    %212 = tpu.dynamic_rotate %19 by %c205_i32 dim 1 : vector<1x256xf32>, i32 -> vector<1x256xf32>
    %c48 = arith.constant 48 : index
    %c0_72 = arith.constant 0 : index
    %213 = vector.load %arg3[%c48, %c0_72] : memref<49x256xf32, #tpu.memory_space<vmem>>, vector<1x256xf32>
    %214 = arith.mulf %213, %212 : vector<1x256xf32>
    %215 = arith.addf %211, %214 : vector<1x256xf32>
    %cst_73 = arith.constant 0.000000e+00 : f32
    %216 = vector.broadcast %cst_73 : f32 to vector<1x256xf32>
    %217 = arith.subf %216, %215 : vector<1x256xf32>
    %218 = math.exp %217 : vector<1x256xf32>
    %cst_74 = arith.constant 1.000000e+00 : f32
    %219 = vector.broadcast %cst_74 : f32 to vector<1x256xf32>
    %220 = arith.addf %219, %218 : vector<1x256xf32>
    %cst_75 = arith.constant 1.000000e+00 : f32
    %221 = vector.broadcast %cst_75 : f32 to vector<1x256xf32>
    %222 = arith.divf %221, %220 : vector<1x256xf32>
    %223 = vector.broadcast %0 : f32 to vector<1x256xf32>
    %224 = arith.mulf %223, %222 : vector<1x256xf32>
    %225 = vector.broadcast %1 : f32 to vector<1x256xf32>
    %226 = arith.addf %224, %225 : vector<1x256xf32>
    %227 = vector.broadcast %226 : vector<1x256xf32> to vector<16x256xf32>
    %228 = arith.mulf %13, %227 : vector<16x256xf32>
    %229 = vector.broadcast %226 : vector<1x256xf32> to vector<16x256xf32>
    %230 = arith.mulf %14, %229 : vector<16x256xf32>
    %cst_76 = arith.constant dense<0xFF800000> : vector<16xf32>
    %231 = vector.multi_reduction <maximumf>, %228, %cst_76 [1] : vector<16x256xf32> to vector<16xf32>
    %232 = vector.shape_cast %231 : vector<16xf32> to vector<16x1xf32>
    %cst_77 = arith.constant dense<0xFF800000> : vector<16xf32>
    %233 = vector.multi_reduction <maximumf>, %230, %cst_77 [1] : vector<16x256xf32> to vector<16xf32>
    %234 = vector.shape_cast %233 : vector<16xf32> to vector<16x1xf32>
    %cst_78 = arith.constant dense<0.000000e+00> : vector<2x1xf32>
    %235 = tpu.matmul %5, %232, %cst_78 {dimension_numbers = #tpu.dot_dimension_numbers<[1], [0], [0], [1], [0, 0, 1, 1], [], []>} : vector<2x16xf32>, vector<16x1xf32>, vector<2x1xf32> -> vector<2x1xf32>
    %cst_79 = arith.constant dense<0.000000e+00> : vector<2x1xf32>
    %236 = tpu.matmul %6, %234, %cst_79 {dimension_numbers = #tpu.dot_dimension_numbers<[1], [0], [0], [1], [0, 0, 1, 1], [], []>} : vector<2x16xf32>, vector<16x1xf32>, vector<2x1xf32> -> vector<2x1xf32>
    %237 = arith.addf %235, %236 : vector<2x1xf32>
    %cst_80 = arith.constant 0.000000e+00 : f32
    %238 = vector.broadcast %cst_80 : f32 to vector<2x1xf32>
    %239 = arith.maximumf %237, %238 : vector<2x1xf32>
    %cst_81 = arith.constant dense<0.000000e+00> : vector<16x1xf32>
    %240 = tpu.matmul %7, %239, %cst_81 {dimension_numbers = #tpu.dot_dimension_numbers<[1], [0], [0], [1], [0, 0, 1, 1], [], []>} : vector<16x2xf32>, vector<2x1xf32>, vector<16x1xf32> -> vector<16x1xf32>
    %cst_82 = arith.constant dense<0.000000e+00> : vector<16x1xf32>
    %241 = tpu.matmul %8, %239, %cst_82 {dimension_numbers = #tpu.dot_dimension_numbers<[1], [0], [0], [1], [0, 0, 1, 1], [], []>} : vector<16x2xf32>, vector<2x1xf32>, vector<16x1xf32> -> vector<16x1xf32>
    %cst_83 = arith.constant 0.000000e+00 : f32
    %242 = vector.broadcast %cst_83 : f32 to vector<16x1xf32>
    %243 = arith.subf %242, %240 : vector<16x1xf32>
    %244 = math.exp %243 : vector<16x1xf32>
    %cst_84 = arith.constant 1.000000e+00 : f32
    %245 = vector.broadcast %cst_84 : f32 to vector<16x1xf32>
    %246 = arith.addf %245, %244 : vector<16x1xf32>
    %cst_85 = arith.constant 1.000000e+00 : f32
    %247 = vector.broadcast %cst_85 : f32 to vector<16x1xf32>
    %248 = arith.divf %247, %246 : vector<16x1xf32>
    %249 = vector.broadcast %248 : vector<16x1xf32> to vector<16x256xf32>
    %250 = arith.mulf %228, %249 : vector<16x256xf32>
    %cst_86 = arith.constant 0.000000e+00 : f32
    %251 = vector.broadcast %cst_86 : f32 to vector<16x1xf32>
    %252 = arith.subf %251, %241 : vector<16x1xf32>
    %253 = math.exp %252 : vector<16x1xf32>
    %cst_87 = arith.constant 1.000000e+00 : f32
    %254 = vector.broadcast %cst_87 : f32 to vector<16x1xf32>
    %255 = arith.addf %254, %253 : vector<16x1xf32>
    %cst_88 = arith.constant 1.000000e+00 : f32
    %256 = vector.broadcast %cst_88 : f32 to vector<16x1xf32>
    %257 = arith.divf %256, %255 : vector<16x1xf32>
    %258 = vector.broadcast %257 : vector<16x1xf32> to vector<16x256xf32>
    %259 = arith.mulf %230, %258 : vector<16x256xf32>
    %cst_89 = arith.constant dense<0.000000e+00> : vector<16x256xf32>
    %260 = tpu.matmul %3, %250, %cst_89 {dimension_numbers = #tpu.dot_dimension_numbers<[1], [0], [0], [1], [0, 0, 1, 1], [], []>} : vector<16x16xf32>, vector<16x256xf32>, vector<16x256xf32> -> vector<16x256xf32>
    %cst_90 = arith.constant dense<0.000000e+00> : vector<16x256xf32>
    %261 = tpu.matmul %4, %259, %cst_90 {dimension_numbers = #tpu.dot_dimension_numbers<[1], [0], [0], [1], [0, 0, 1, 1], [], []>} : vector<16x16xf32>, vector<16x256xf32>, vector<16x256xf32> -> vector<16x256xf32>
    %262 = arith.addf %260, %261 : vector<16x256xf32>
    %263 = vector.broadcast %2 : vector<16x1xf32> to vector<16x256xf32>
    %264 = arith.addf %262, %263 : vector<16x256xf32>
    %265 = vector.broadcast %226 : vector<1x256xf32> to vector<16x256xf32>
    %266 = arith.mulf %264, %265 : vector<16x256xf32>
    %c0_91 = arith.constant 0 : index
    %c0_92 = arith.constant 0 : index
    %c0_93 = arith.constant 0 : index
    %267 = vector.load %arg13[%c0_91, %c0_92, %c0_93] : memref<1x16x256xf32, #tpu.memory_space<vmem>>, vector<1x16x256xf32>
    %268 = vector.shape_cast %267 : vector<1x16x256xf32> to vector<16x256xf32>
    %269 = vector.shape_cast %266 : vector<16x256xf32> to vector<1x16x256xf32>
    tpu.vector_store %arg13[%c0_91, %c0_92, %c0_93], %269 {strides = array<i32>} : memref<1x16x256xf32, #tpu.memory_space<vmem>>, vector<1x16x256xf32>,
    return
  }
  func.func @transform_0(%arg0: i32) -> (i32, i32, i32) {
    %c0_i32 = arith.constant 0 : i32
    %c0_i32_0 = arith.constant 0 : i32
    %c0_i32_1 = arith.constant 0 : i32
    return %arg0, %c0_i32, %c0_i32_0 : i32, i32, i32
  }
  func.func @transform_1(%arg0: i32) -> (i32, i32, i32) {
    %c0_i32 = arith.constant 0 : i32
    %c0_i32_0 = arith.constant 0 : i32
    %c0_i32_1 = arith.constant 0 : i32
    return %arg0, %c0_i32, %c0_i32_0 : i32, i32, i32
  }
  func.func @transform_2(%arg0: i32) -> (i32, i32) {
    %c0_i32 = arith.constant 0 : i32
    %c0_i32_0 = arith.constant 0 : i32
    %c0_i32_1 = arith.constant 0 : i32
    return %c0_i32, %c0_i32_0 : i32, i32
  }
  func.func @transform_3(%arg0: i32) -> (i32, i32) {
    %c0_i32 = arith.constant 0 : i32
    %c0_i32_0 = arith.constant 0 : i32
    %c0_i32_1 = arith.constant 0 : i32
    return %c0_i32, %c0_i32_0 : i32, i32
  }
  func.func @transform_4(%arg0: i32) -> (i32, i32) {
    %c0_i32 = arith.constant 0 : i32
    %c0_i32_0 = arith.constant 0 : i32
    %c0_i32_1 = arith.constant 0 : i32
    return %c0_i32, %c0_i32_0 : i32, i32
  }
  func.func @transform_5(%arg0: i32) -> (i32, i32) {
    %c0_i32 = arith.constant 0 : i32
    %c0_i32_0 = arith.constant 0 : i32
    %c0_i32_1 = arith.constant 0 : i32
    return %c0_i32, %c0_i32_0 : i32, i32
  }
  func.func @transform_6(%arg0: i32) -> (i32, i32) {
    %c0_i32 = arith.constant 0 : i32
    %c0_i32_0 = arith.constant 0 : i32
    %c0_i32_1 = arith.constant 0 : i32
    return %c0_i32, %c0_i32_0 : i32, i32
  }
  func.func @transform_7(%arg0: i32) -> (i32, i32) {
    %c0_i32 = arith.constant 0 : i32
    %c0_i32_0 = arith.constant 0 : i32
    %c0_i32_1 = arith.constant 0 : i32
    return %c0_i32, %c0_i32_0 : i32, i32
  }
  func.func @transform_8(%arg0: i32) -> (i32, i32) {
    %c0_i32 = arith.constant 0 : i32
    %c0_i32_0 = arith.constant 0 : i32
    %c0_i32_1 = arith.constant 0 : i32
    return %c0_i32, %c0_i32_0 : i32, i32
  }
  func.func @transform_9(%arg0: i32) -> (i32, i32) {
    %c0_i32 = arith.constant 0 : i32
    %c0_i32_0 = arith.constant 0 : i32
    %c0_i32_1 = arith.constant 0 : i32
    return %c0_i32, %c0_i32_0 : i32, i32
  }
  func.func @transform_10(%arg0: i32) -> i32 {
    %c0_i32 = arith.constant 0 : i32
    %c0_i32_0 = arith.constant 0 : i32
    return %c0_i32 : i32
  }
  func.func @transform_11(%arg0: i32) -> i32 {
    %c0_i32 = arith.constant 0 : i32
    %c0_i32_0 = arith.constant 0 : i32
    return %c0_i32 : i32
  }
  func.func @transform_12(%arg0: i32) -> (i32, i32, i32) {
    %c0_i32 = arith.constant 0 : i32
    %c0_i32_0 = arith.constant 0 : i32
    %c0_i32_1 = arith.constant 0 : i32
    return %arg0, %c0_i32, %c0_i32_0 : i32, i32, i32
  }
}

</mosaic_0001>

<llo_original>
// kernel: mul.5
$region0: #{mul.5}
  %s0 = inlined_call_operand.vmem [shape: f32[7,7], index: 0, kind: input, shape index: {}]
  %s1 = inlined_call_operand.vmem [shape: f32[49], index: 1, kind: output, shape index: {}]
  $region1: #{mul.5} parent=0
    #allocation0 [shape = 'u8[4096]{0}', space=vmem, size = 0x1000, scoped, tag = 'scoped mem for output reshape']
    %v2 = vld [vmem:[%s0] sm:$0x1]
    %vm3 = vcmask 56320
    %4 = vst.msk [vmem:[#allocation0] sm:$0x1] %vm3, %v2
    %s5 = scalar_lea.vmem %s0, 6
    %v6 = vld [vmem:[%s5] sm:$0x1]
    %7 = vrot.lane.b32.xlu0 %v6, 42
    %v8 = vpop.permute.xlu0 %7
    %vm9 = vcmask 400720
    %10 = vst.msk [vmem:[#allocation0] sm:$0x1] %vm9, %v8
    %s11 = scalar_lea.vmem %s0, 5
    %v12 = vld [vmem:[%s11] sm:$0x1]
    %13 = vrot.lane.b32.xlu0 %v12, 35
    %v14 = vpop.permute.xlu0 %13
    %vm15 = vcmask 343320
    %16 = vst.msk [vmem:[#allocation0] sm:$0x1] %vm15, %v14
    %s17 = scalar_lea.vmem %s0, 4
    %v18 = vld [vmem:[%s17] sm:$0x1]
    %19 = vrot.lane.b32.xlu0 %v18, 28
    %v20 = vpop.permute.xlu0 %19
    %vm21 = vcmask 285920
    %22 = vst.msk [vmem:[#allocation0] sm:$0x1] %vm21, %v20
    %s23 = scalar_lea.vmem %s0, 3
    %v24 = vld [vmem:[%s23] sm:$0x1]
    %25 = vrot.lane.b32.xlu0 %v24, 21
    %v26 = vpop.permute.xlu0 %25
    %vm27 = vcmask 228520
    %28 = vst.msk [vmem:[#allocation0] sm:$0x1] %vm27, %v26
    %s29 = scalar_lea.vmem %s0, 2
    %v30 = vld [vmem:[%s29] sm:$0x1]
    %31 = vrot.lane.b32.xlu0 %v30, 14
    %v32 = vpop.permute.xlu0 %31
    %vm33 = vcmask 171120
    %34 = vst.msk [vmem:[#allocation0] sm:$0x1] %vm33, %v32
    %s35 = scalar_lea.vmem %s0, 1
    %v36 = vld [vmem:[%s35] sm:$0x1]
    %37 = vrot.lane.b32.xlu0 %v36, 7
    %v38 = vpop.permute.xlu0 %37
    %vm39 = vcmask 113720
    %40 = vst.msk [vmem:[#allocation0] sm:$0x1] %vm39, %v38
    %s42 = sshll.u32 1, 1
    %s43 = ssub.s32 %s42, 1
    %v45 = vld [vmem:[#allocation0] sm:%s43]
    %s46 = sshll.u32 1, 1
    %s47 = ssub.s32 %s46, 1
    %48 = vst [vmem:[%s1] sm:%s47] %v45

// kernel: camf_forward.1
$region0: #{camf_forward.1}
  #allocation0 [shape = 'u32[]', space=smem, size = 0x4, offset = 0x4, fixed_abs, tag = 'smem constant byte address 0x4 - core index']
  #allocation1 [shape = 'u32[144,128]{1,0:T(1,128)}', space=vmem, size = 0x12000, scoped, tag = 'internal scratch']
  #allocation2 [shape = 'f32[1]{0:T(128)S(6)}', space=smem, size = 0x200, scoped, tag = 'scoped memory for camf_forward.1']
  #allocation3 [shape = 'f32[1]{0:T(128)S(6)}', space=smem, size = 0x200, scoped, tag = 'scoped memory for camf_forward.1']
  %s0 = inlined_call_operand.vmem [shape: f32[2,16,256], index: 0, kind: input, shape index: {}]
  %s1 = inlined_call_operand.vmem [shape: f32[2,16,256], index: 1, kind: input, shape index: {}]
  %s2 = inlined_call_operand.vmem [shape: f32[49,256], index: 2, kind: input, shape index: {}]
  %s3 = inlined_call_operand.vmem [shape: f32[2,16], index: 3, kind: input, shape index: {}]
  %s4 = inlined_call_operand.vmem [shape: f32[2,16], index: 4, kind: input, shape index: {}]
  %s5 = inlined_call_operand.vmem [shape: f32[16,2], index: 5, kind: input, shape index: {}]
  %s6 = inlined_call_operand.vmem [shape: f32[16,2], index: 6, kind: input, shape index: {}]
  %s7 = inlined_call_operand.vmem [shape: f32[16,16], index: 7, kind: input, shape index: {}]
  %s8 = inlined_call_operand.vmem [shape: f32[16,16], index: 8, kind: input, shape index: {}]
  %s9 = inlined_call_operand.vmem [shape: f32[16,1], index: 9, kind: input, shape index: {}]
  %s10 = inlined_call_operand.<no memory space> [shape: f32[1], index: 10, kind: input, shape index: {}]
  %s11 = inlined_call_operand.<no memory space> [shape: f32[1], index: 11, kind: input, shape index: {}]
  %s12 = inlined_call_operand.vmem [shape: f32[2,16,256], index: 12, kind: output, shape index: {}]
  %s13 = sld [smem:[#allocation0]]
  $region81: #{camf_forward.1} parent=0
    _
  %s15 = ssub.s32 1, %s13
  %s16 = scalar_select 0, %s15, %s13
  %17 = sst [smem:[#allocation2]] %s10
  %18 = sst [smem:[#allocation3]] %s11
  loop: start=0, step=1, limit=4
  $region2: #{camf_forward.1} parent=0 // loop_pre_header
    _
  $region3: #{camf_forward.1} parent=0 // loop_header
    %s20 = sphi 0, %s24
    %p21 = scmp.ge.s32.totalorder %s20, 4
    %s30 = sphi 0, %s32
    %s33 = sphi 0, %s30
    %s34 = sphi 0, %s33
    %s50 = sphi 0, %s34
    %s56 = sphi 0, %s58
    %s59 = sphi 0, %s56
    %s60 = sphi 0, %s59
    %s76 = sphi 0, %s60
    %s80 = sphi 0, %s80
    %s82 = sphi 0, %s80
    %s83 = sphi 0, %s82
    %s97 = sphi 0, %s83
    %s101 = sphi 0, %s101
    %s103 = sphi 0, %s101
    %s104 = sphi 0, %s103
    %s118 = sphi 0, %s104
    %s122 = sphi 0, %s122
    %s124 = sphi 0, %s122
    %s125 = sphi 0, %s124
    %s139 = sphi 0, %s125
    %s143 = sphi 0, %s143
    %s145 = sphi 0, %s143
    %s146 = sphi 0, %s145
    %s160 = sphi 0, %s146
    %s164 = sphi 0, %s164
    %s166 = sphi 0, %s164
    %s167 = sphi 0, %s166
    %s181 = sphi 0, %s167
    %s185 = sphi 0, %s185
    %s187 = sphi 0, %s185
    %s188 = sphi 0, %s187
    %s202 = sphi 0, %s188
    %s206 = sphi 0, %s206
    %s208 = sphi 0, %s206
    %s209 = sphi 0, %s208
    %s223 = sphi 0, %s209
    %s227 = sphi 0, %s227
    %s229 = sphi 0, %s227
    %s230 = sphi 0, %s229
    %s244 = sphi 0, %s230
    %s248 = sphi 0, %s248
    %s250 = sphi 0, %s248
    %s251 = sphi 0, %s250
    %s265 = sphi 0, %s251
    %s269 = sphi 0, %s269
    %s271 = sphi 0, %s269
    %s272 = sphi 0, %s271
    %s286 = sphi 0, %s272
    %s292 = sphi 0, %s294
    %s295 = sphi 0, %s292
    %s296 = sphi 0, %s295
    %s312 = sphi 0, %s296
  $region4: #{camf_forward.1} parent=0 // loop_header_branch
    %23 = sbr.rel (%p21) target = $region8
  $region5: #{camf_forward.1} parent=0 // loop_body
    %s25 = ssub.s32 %s20, 1
    %s26 = ssub.s32 %s20, 2
    %s27 = sadd.s32 %s20, 1
    %s28 = ssub.s32 %s20, %s27
    %p29 = scmp.eq.s32.totalorder %s28, 0
    %s31 = sadd.s32 %s30, 1
    %s32 = scalar_select %p29, %s30, %s31
    %p35 = pneg %p29
    %p36 = scmp.eq.s32.totalorder %s20, 1
    %p37 = por %p35, %p36
    %p38 = scmp.ne.s32.totalorder %s30, %s33
    %p39 = scmp.eq.s32.totalorder %s20, 0
    %p40 = por %p38, %p39
    %p41 = scmp.ne.s32.totalorder %s30, %s33
    %p42 = scmp.eq.s32.totalorder %s25, 1
    %p43 = por %p41, %p42
    %p44 = scmp.ne.s32.totalorder %s33, %s34
    %p45 = scmp.eq.s32.totalorder %s25, 0
    %p46 = por %p44, %p45
    %p47 = scmp.ne.s32.totalorder %s33, %s34
    %p48 = scmp.eq.s32.totalorder %s26, 1
    %p49 = por %p47, %p48
    %p51 = scmp.ne.s32.totalorder %s34, %s50
    %p52 = scmp.eq.s32.totalorder %s26, 0
    %p53 = por %p51, %p52
    %s54 = ssub.s32 %s20, %s27
    %p55 = scmp.eq.s32.totalorder %s54, 0
    %s57 = sadd.s32 %s56, 1
    %s58 = scalar_select %p55, %s56, %s57
    %p61 = pneg %p55
    %p62 = scmp.eq.s32.totalorder %s20, 1
    %p63 = por %p61, %p62
    %p64 = scmp.ne.s32.totalorder %s56, %s59
    %p65 = scmp.eq.s32.totalorder %s20, 0
    %p66 = por %p64, %p65
    %p67 = scmp.ne.s32.totalorder %s56, %s59
    %p68 = scmp.eq.s32.totalorder %s25, 1
    %p69 = por %p67, %p68
    %p70 = scmp.ne.s32.totalorder %s59, %s60
    %p71 = scmp.eq.s32.totalorder %s25, 0
    %p72 = por %p70, %p71
    %p73 = scmp.ne.s32.totalorder %s59, %s60
    %p74 = scmp.eq.s32.totalorder %s26, 1
    %p75 = por %p73, %p74
    %p77 = scmp.ne.s32.totalorder %s60, %s76
    %p78 = scmp.eq.s32.totalorder %s26, 0
    %p79 = por %p77, %p78
    %s81 = sadd.s32 %s80, 1
    %p84 = scmp.eq.s32.totalorder %s20, 1
    %p85 = scmp.ne.s32.totalorder %s80, %s82
    %p86 = scmp.eq.s32.totalorder %s20, 0
    %p87 = por %p85, %p86
    %p88 = scmp.ne.s32.totalorder %s80, %s82
    %p89 = scmp.eq.s32.totalorder %s25, 1
    %p90 = por %p88, %p89
    %p91 = scmp.ne.s32.totalorder %s82, %s83
    %p92 = scmp.eq.s32.totalorder %s25, 0
    %p93 = por %p91, %p92
    %p94 = scmp.ne.s32.totalorder %s82, %s83
    %p95 = scmp.eq.s32.totalorder %s26, 1
    %p96 = por %p94, %p95
    %p98 = scmp.ne.s32.totalorder %s83, %s97
    %p99 = scmp.eq.s32.totalorder %s26, 0
    %p100 = por %p98, %p99
    %s102 = sadd.s32 %s101, 1
    %p105 = scmp.eq.s32.totalorder %s20, 1
    %p106 = scmp.ne.s32.totalorder %s101, %s103
    %p107 = scmp.eq.s32.totalorder %s20, 0
    %p108 = por %p106, %p107
    %p109 = scmp.ne.s32.totalorder %s101, %s103
    %p110 = scmp.eq.s32.totalorder %s25, 1
    %p111 = por %p109, %p110
    %p112 = scmp.ne.s32.totalorder %s103, %s104
    %p113 = scmp.eq.s32.totalorder %s25, 0
    %p114 = por %p112, %p113
    %p115 = scmp.ne.s32.totalorder %s103, %s104
    %p116 = scmp.eq.s32.totalorder %s26, 1
    %p117 = por %p115, %p116
    %p119 = scmp.ne.s32.totalorder %s104, %s118
    %p120 = scmp.eq.s32.totalorder %s26, 0
    %p121 = por %p119, %p120
    %s123 = sadd.s32 %s122, 1
    %p126 = scmp.eq.s32.totalorder %s20, 1
    %p127 = scmp.ne.s32.totalorder %s122, %s124
    %p128 = scmp.eq.s32.totalorder %s20, 0
    %p129 = por %p127, %p128
    %p130 = scmp.ne.s32.totalorder %s122, %s124
    %p131 = scmp.eq.s32.totalorder %s25, 1
    %p132 = por %p130, %p131
    %p133 = scmp.ne.s32.totalorder %s124, %s125
    %p134 = scmp.eq.s32.totalorder %s25, 0
    %p135 = por %p133, %p134
    %p136 = scmp.ne.s32.totalorder %s124, %s125
    %p137 = scmp.eq.s32.totalorder %s26, 1
    %p138 = por %p136, %p137
    %p140 = scmp.ne.s32.totalorder %s125, %s139
    %p141 = scmp.eq.s32.totalorder %s26, 0
    %p142 = por %p140, %p141
    %s144 = sadd.s32 %s143, 1
    %p147 = scmp.eq.s32.totalorder %s20, 1
    %p148 = scmp.ne.s32.totalorder %s143, %s145
    %p149 = scmp.eq.s32.totalorder %s20, 0
    %p150 = por %p148, %p149
    %p151 = scmp.ne.s32.totalorder %s143, %s145
    %p152 = scmp.eq.s32.totalorder %s25, 1
    %p153 = por %p151, %p152
    %p154 = scmp.ne.s32.totalorder %s145, %s146
    %p155 = scmp.eq.s32.totalorder %s25, 0
    %p156 = por %p154, %p155
    %p157 = scmp.ne.s32.totalorder %s145, %s146
    %p158 = scmp.eq.s32.totalorder %s26, 1
    %p159 = por %p157, %p158
    %p161 = scmp.ne.s32.totalorder %s146, %s160
    %p162 = scmp.eq.s32.totalorder %s26, 0
    %p163 = por %p161, %p162
    %s165 = sadd.s32 %s164, 1
    %p168 = scmp.eq.s32.totalorder %s20, 1
    %p169 = scmp.ne.s32.totalorder %s164, %s166
    %p170 = scmp.eq.s32.totalorder %s20, 0
    %p171 = por %p169, %p170
    %p172 = scmp.ne.s32.totalorder %s164, %s166
    %p173 = scmp.eq.s32.totalorder %s25, 1
    %p174 = por %p172, %p173
    %p175 = scmp.ne.s32.totalorder %s166, %s167
    %p176 = scmp.eq.s32.totalorder %s25, 0
    %p177 = por %p175, %p176
    %p178 = scmp.ne.s32.totalorder %s166, %s167
    %p179 = scmp.eq.s32.totalorder %s26, 1
    %p180 = por %p178, %p179
    %p182 = scmp.ne.s32.totalorder %s167, %s181
    %p183 = scmp.eq.s32.totalorder %s26, 0
    %p184 = por %p182, %p183
    %s186 = sadd.s32 %s185, 1
    %p189 = scmp.eq.s32.totalorder %s20, 1
    %p190 = scmp.ne.s32.totalorder %s185, %s187
    %p191 = scmp.eq.s32.totalorder %s20, 0
    %p192 = por %p190, %p191
    %p193 = scmp.ne.s32.totalorder %s185, %s187
    %p194 = scmp.eq.s32.totalorder %s25, 1
    %p195 = por %p193, %p194
    %p196 = scmp.ne.s32.totalorder %s187, %s188
    %p197 = scmp.eq.s32.totalorder %s25, 0
    %p198 = por %p196, %p197
    %p199 = scmp.ne.s32.totalorder %s187, %s188
    %p200 = scmp.eq.s32.totalorder %s26, 1
    %p201 = por %p199, %p200
    %p203 = scmp.ne.s32.totalorder %s188, %s202
    %p204 = scmp.eq.s32.totalorder %s26, 0
    %p205 = por %p203, %p204
    %s207 = sadd.s32 %s206, 1
    %p210 = scmp.eq.s32.totalorder %s20, 1
    %p211 = scmp.ne.s32.totalorder %s206, %s208
    %p212 = scmp.eq.s32.totalorder %s20, 0
    %p213 = por %p211, %p212
    %p214 = scmp.ne.s32.totalorder %s206, %s208
    %p215 = scmp.eq.s32.totalorder %s25, 1
    %p216 = por %p214, %p215
    %p217 = scmp.ne.s32.totalorder %s208, %s209
    %p218 = scmp.eq.s32.totalorder %s25, 0
    %p219 = por %p217, %p218
    %p220 = scmp.ne.s32.totalorder %s208, %s209
    %p221 = scmp.eq.s32.totalorder %s26, 1
    %p222 = por %p220, %p221
    %p224 = scmp.ne.s32.totalorder %s209, %s223
    %p225 = scmp.eq.s32.totalorder %s26, 0
    %p226 = por %p224, %p225
    %s228 = sadd.s32 %s227, 1
    %p231 = scmp.eq.s32.totalorder %s20, 1
    %p232 = scmp.ne.s32.totalorder %s227, %s229
    %p233 = scmp.eq.s32.totalorder %s20, 0
    %p234 = por %p232, %p233
    %p235 = scmp.ne.s32.totalorder %s227, %s229
    %p236 = scmp.eq.s32.totalorder %s25, 1
    %p237 = por %p235, %p236
    %p238 = scmp.ne.s32.totalorder %s229, %s230
    %p239 = scmp.eq.s32.totalorder %s25, 0
    %p240 = por %p238, %p239
    %p241 = scmp.ne.s32.totalorder %s229, %s230
    %p242 = scmp.eq.s32.totalorder %s26, 1
    %p243 = por %p241, %p242
    %p245 = scmp.ne.s32.totalorder %s230, %s244
    %p246 = scmp.eq.s32.totalorder %s26, 0
    %p247 = por %p245, %p246
    %s249 = sadd.s32 %s248, 1
    %p252 = scmp.eq.s32.totalorder %s20, 1
    %p253 = scmp.ne.s32.totalorder %s248, %s250
    %p254 = scmp.eq.s32.totalorder %s20, 0
    %p255 = por %p253, %p254
    %p256 = scmp.ne.s32.totalorder %s248, %s250
    %p257 = scmp.eq.s32.totalorder %s25, 1
    %p258 = por %p256, %p257
    %p259 = scmp.ne.s32.totalorder %s250, %s251
    %p260 = scmp.eq.s32.totalorder %s25, 0
    %p261 = por %p259, %p260
    %p262 = scmp.ne.s32.totalorder %s250, %s251
    %p263 = scmp.eq.s32.totalorder %s26, 1
    %p264 = por %p262, %p263
    %p266 = scmp.ne.s32.totalorder %s251, %s265
    %p267 = scmp.eq.s32.totalorder %s26, 0
    %p268 = por %p266, %p267
    %s270 = sadd.s32 %s269, 1
    %p273 = scmp.eq.s32.totalorder %s20, 1
    %p274 = scmp.ne.s32.totalorder %s269, %s271
    %p275 = scmp.eq.s32.totalorder %s20, 0
    %p276 = por %p274, %p275
    %p277 = scmp.ne.s32.totalorder %s269, %s271
    %p278 = scmp.eq.s32.totalorder %s25, 1
    %p279 = por %p277, %p278
    %p280 = scmp.ne.s32.totalorder %s271, %s272
    %p281 = scmp.eq.s32.totalorder %s25, 0
    %p282 = por %p280, %p281
    %p283 = scmp.ne.s32.totalorder %s271, %s272
    %p284 = scmp.eq.s32.totalorder %s26, 1
    %p285 = por %p283, %p284
    %p287 = scmp.ne.s32.totalorder %s272, %s286
    %p288 = scmp.eq.s32.totalorder %s26, 0
    %p289 = por %p287, %p288
    %s290 = ssub.s32 %s20, %s27
    %p291 = scmp.eq.s32.totalorder %s290, 0
    %s293 = sadd.s32 %s292, 1
    %s294 = scalar_select %p291, %s292, %s293
    %p297 = pneg %p291
    %p298 = scmp.eq.s32.totalorder %s20, 1
    %p299 = por %p297, %p298
    %p300 = scmp.ne.s32.totalorder %s292, %s295
    %p301 = scmp.eq.s32.totalorder %s20, 0
    %p302 = por %p300, %p301
    %p303 = scmp.ne.s32.totalorder %s292, %s295
    %p304 = scmp.eq.s32.totalorder %s25, 1
    %p305 = por %p303, %p304
    %p306 = scmp.ne.s32.totalorder %s295, %s296
    %p307 = scmp.eq.s32.totalorder %s25, 0
    %p308 = por %p306, %p307
    %p309 = scmp.ne.s32.totalorder %s295, %s296
    %p310 = scmp.eq.s32.totalorder %s26, 1
    %p311 = por %p309, %p310
    %p313 = scmp.ne.s32.totalorder %s296, %s312
    %p314 = scmp.eq.s32.totalorder %s26, 0
    %p315 = por %p313, %p314
    %p316 = scmp.le.s32.totalorder 1, %s20
    %p317 = scmp.lt.s32.totalorder %s20, 3
    %p318 = pnand %p316, %p317
    %p319 = pneg %p318
    // Predicated region
    $region9: #{camf_forward.1} parent=5 // pred_check
      _
    $region10: #{camf_forward.1} parent=5 // pred_check_branch
      %321 = sbr.rel (%p318) target = $region12
    $region11: #{camf_forward.1} parent=5 // pred_region
      %s322 = ssub.s32 %s20, 1
      // Predicated region
      $region13: #{camf_forward.1} parent=11 // pred_check
        %p323 = pneg %p93
      $region14: #{camf_forward.1} parent=11 // pred_check_branch
        %325 = sbr.rel (%p323) target = $region16
      $region15: #{camf_forward.1} parent=11 // pred_region
        _
      $region16: #{camf_forward.1} parent=11 // pred_fallthru
        _
      // Predicated region
      $region17: #{camf_forward.1} parent=11 // pred_check
        %p326 = pneg %p114
      $region18: #{camf_forward.1} parent=11 // pred_check_branch
        %328 = sbr.rel (%p326) target = $region20
      $region19: #{camf_forward.1} parent=11 // pred_region
        _
      $region20: #{camf_forward.1} parent=11 // pred_fallthru
        _
      // Predicated region
      $region21: #{camf_forward.1} parent=11 // pred_check
        %p329 = pneg %p135
      $region22: #{camf_forward.1} parent=11 // pred_check_branch
        %331 = sbr.rel (%p329) target = $region24
      $region23: #{camf_forward.1} parent=11 // pred_region
        _
      $region24: #{camf_forward.1} parent=11 // pred_fallthru
        _
      // Predicated region
      $region25: #{camf_forward.1} parent=11 // pred_check
        %p332 = pneg %p156
      $region26: #{camf_forward.1} parent=11 // pred_check_branch
        %334 = sbr.rel (%p332) target = $region28
      $region27: #{camf_forward.1} parent=11 // pred_region
        _
      $region28: #{camf_forward.1} parent=11 // pred_fallthru
        _
      // Predicated region
      $region29: #{camf_forward.1} parent=11 // pred_check
        %p335 = pneg %p177
      $region30: #{camf_forward.1} parent=11 // pred_check_branch
        %337 = sbr.rel (%p335) target = $region32
      $region31: #{camf_forward.1} parent=11 // pred_region
        _
      $region32: #{camf_forward.1} parent=11 // pred_fallthru
        _
      // Predicated region
      $region33: #{camf_forward.1} parent=11 // pred_check
        %p338 = pneg %p198
      $region34: #{camf_forward.1} parent=11 // pred_check_branch
        %340 = sbr.rel (%p338) target = $region36
      $region35: #{camf_forward.1} parent=11 // pred_region
        _
      $region36: #{camf_forward.1} parent=11 // pred_fallthru
        _
      // Predicated region
      $region37: #{camf_forward.1} parent=11 // pred_check
        %p341 = pneg %p219
      $region38: #{camf_forward.1} parent=11 // pred_check_branch
        %343 = sbr.rel (%p341) target = $region40
      $region39: #{camf_forward.1} parent=11 // pred_region
        _
      $region40: #{camf_forward.1} parent=11 // pred_fallthru
        _
      // Predicated region
      $region41: #{camf_forward.1} parent=11 // pred_check
        %p344 = pneg %p240
      $region42: #{camf_forward.1} parent=11 // pred_check_branch
        %346 = sbr.rel (%p344) target = $region44
      $region43: #{camf_forward.1} parent=11 // pred_region
        _
      $region44: #{camf_forward.1} parent=11 // pred_fallthru
        _
      // Predicated region
      $region45: #{camf_forward.1} parent=11 // pred_check
        %p347 = pneg %p261
      $region46: #{camf_forward.1} parent=11 // pred_check_branch
        %349 = sbr.rel (%p347) target = $region48
      $region47: #{camf_forward.1} parent=11 // pred_region
        _
      $region48: #{camf_forward.1} parent=11 // pred_fallthru
        _
      // Predicated region
      $region49: #{camf_forward.1} parent=11 // pred_check
        %p350 = pneg %p282
      $region50: #{camf_forward.1} parent=11 // pred_check_branch
        %352 = sbr.rel (%p350) target = $region52
      $region51: #{camf_forward.1} parent=11 // pred_region
        _
      $region52: #{camf_forward.1} parent=11 // pred_fallthru
        _
    $region12: #{camf_forward.1} parent=5 // pred_fallthru
      _
    %p353 = scmp.lt.s32.totalorder %s20, 2
    // Predicated region
    $region53: #{camf_forward.1} parent=5 // pred_check
      %p354 = pneg %p353
    $region54: #{camf_forward.1} parent=5 // pred_check_branch
      %356 = sbr.rel (%p354) target = $region56
    $region55: #{camf_forward.1} parent=5 // pred_region
      // Predicated region
      $region57: #{camf_forward.1} parent=55 // pred_check
        %p357 = pneg %p40
      $region58: #{camf_forward.1} parent=55 // pred_check_branch
        %359 = sbr.rel (%p357) target = $region60
      $region59: #{camf_forward.1} parent=55 // pred_region
        %p360 = scmp.lt.s32.totalorder %s20, 1
        %s361 = scalar_select %p360, %s20, 1
        %s362 = smul.addr %s361, 4
        %s363 = smul.addr %s362, 8
        %s364 = scalar_lea.vmem %s0, %s363
      $region60: #{camf_forward.1} parent=55 // pred_fallthru
        _
      // Predicated region
      $region61: #{camf_forward.1} parent=55 // pred_check
        %p365 = pneg %p66
      $region62: #{camf_forward.1} parent=55 // pred_check_branch
        %367 = sbr.rel (%p365) target = $region64
      $region63: #{camf_forward.1} parent=55 // pred_region
        %p368 = scmp.lt.s32.totalorder %s20, 1
        %s369 = scalar_select %p368, %s20, 1
        %s370 = smul.addr %s369, 4
        %s371 = smul.addr %s370, 8
        %s372 = scalar_lea.vmem %s1, %s371
      $region64: #{camf_forward.1} parent=55 // pred_fallthru
        _
    $region56: #{camf_forward.1} parent=5 // pred_fallthru
      _
    %p373 = scmp.le.s32.totalorder 1, %s20
    %p374 = scmp.lt.s32.totalorder %s20, 3
    %p375 = pnand %p373, %p374
    %p376 = pneg %p375
    // Predicated region
    $region65: #{camf_forward.1} parent=5 // pred_check
      _
    $region66: #{camf_forward.1} parent=5 // pred_check_branch
      %378 = sbr.rel (%p375) target = $region68
    $region67: #{camf_forward.1} parent=5 // pred_region
      %s379 = ssub.s32 %s20, 1
      %p380 = scmp.lt.s32.totalorder %s25, 1
      %s381 = scalar_select %p380, %s25, 1
      %s382 = smul.addr %s381, 4
      %s383 = smul.addr %s382, 8
      %s384 = scalar_lea.vmem %s0, %s383
      %p385 = pneg %p46
      %p386 = pneg %p43
      %p387 = scmp.lt.s32.totalorder %s25, 1
      %s388 = scalar_select %p387, %s25, 1
      %s389 = smul.addr %s388, 4
      %s390 = smul.addr %s389, 8
      %s391 = scalar_lea.vmem %s1, %s390
      %p392 = pneg %p72
      %p393 = pneg %p69
      %p394 = pneg %p93
      %p395 = pneg %p90
      %p396 = pneg %p114
      %p397 = pneg %p111
      %p398 = pneg %p135
      %p399 = pneg %p132
      %p400 = pneg %p156
      %p401 = pneg %p153
      %p402 = pneg %p177
      %p403 = pneg %p174
      %p404 = pneg %p198
      %p405 = pneg %p195
      %p406 = pneg %p219
      %p407 = pneg %p216
      %p408 = pneg %p240
      %p409 = pneg %p237
      %p410 = pneg %p261
      %p411 = pneg %p258
      %p412 = pneg %p282
      %p413 = pneg %p279
      %p414 = pneg %p308
      %p415 = pneg %p305
      %p416 = scmp.lt.s32.totalorder %s25, 1
      %s417 = scalar_select %p416, %s25, 1
      %s418 = smul.addr %s417, 4
      %s419 = smul.addr %s418, 8
      %s420 = scalar_lea.vmem %s12, %s419
      %p421 = scmp.lt.s32.totalorder %s25, 1
      %s422 = scalar_select %p421, %s25, 1
      %s423 = smul.addr %s422, 4
      %s424 = smul.addr %s423, 8
      %s425 = scalar_lea.vmem %s0, %s424
      %p426 = scmp.lt.s32.totalorder %s25, 1
      %s427 = scalar_select %p426, %s25, 1
      %s428 = smul.addr %s427, 4
      %s429 = smul.addr %s428, 8
      %s430 = scalar_lea.vmem %s1, %s429
      %p431 = scmp.lt.s32.totalorder %s25, 1
      %s432 = scalar_select %p431, %s25, 1
      %s433 = smul.addr %s432, 4
      %s434 = smul.addr %s433, 8
      %s435 = scalar_lea.vmem %s12, %s434
      %s436 = sld [smem:[#allocation2]]
      %s437 = sld [smem:[#allocation3]]
      %v438 = vld [vmem:[%s9] sm:$0xff]
      %v439 = vld [vmem:[%s9 + $0x8] sm:$0xff]
      %v440 = vld [vmem:[%s7] sm:$0xff]
      %v441 = vld [vmem:[%s7 + $0x8] sm:$0xff]
      %v442 = vld [vmem:[%s8] sm:$0xff]
      %v443 = vld [vmem:[%s8 + $0x8] sm:$0xff]
      %v444 = vld [vmem:[%s3] sm:$0x3]
      %v445 = vld [vmem:[%s4] sm:$0x3]
      %v446 = vld [vmem:[%s5] sm:$0xff]
      %v447 = vld [vmem:[%s5 + $0x8] sm:$0xff]
      %v448 = vld [vmem:[%s6] sm:$0xff]
      %v449 = vld [vmem:[%s6 + $0x8] sm:$0xff]
      %v450 = vld [vmem:[%s425] sm:$0xff]
      %v451 = vld [vmem:[%s425 + $0x8] sm:$0xff]
      %v452 = vld [vmem:[%s425 + $0x10] sm:$0xff]
      %v453 = vld [vmem:[%s425 + $0x18] sm:$0xff]
      %v454 = vld [vmem:[%s430] sm:$0xff]
      %v455 = vld [vmem:[%s430 + $0x8] sm:$0xff]
      %v456 = vld [vmem:[%s430 + $0x10] sm:$0xff]
      %v457 = vld [vmem:[%s430 + $0x18] sm:$0xff]
      %v458 = vmul.f32 %v450, %v454
      %v459 = vmul.f32 %v451, %v455
      %v460 = vmul.f32 %v452, %v456
      %v461 = vmul.f32 %v453, %v457
      %v462 = vadd.f32 %v450, %v454
      %v463 = vadd.f32 %v451, %v455
      %v464 = vadd.f32 %v452, %v456
      %v465 = vadd.f32 %v453, %v457
      %v466 = vmax.f32 %v458, %v460
      %v467 = vrot.slane %v466, 4
      %v468 = vmax.f32 %v466, %v467
      %v469 = vrot.slane %v468, 2
      %v470 = vmax.f32 %v468, %v469
      %v471 = vrot.slane %v470, 1
      %v472 = vmax.f32 %v470, %v471
      %v473 = vmax.f32 %v459, %v461
      %v474 = vrot.slane %v473, 4
      %v475 = vmax.f32 %v473, %v474
      %v476 = vrot.slane %v475, 2
      %v477 = vmax.f32 %v475, %v476
      %v478 = vrot.slane %v477, 1
      %v479 = vmax.f32 %v477, %v478
      %v480 = vmax.f32 %v462, %v464
      %v481 = vrot.slane %v480, 4
      %v482 = vmax.f32 %v480, %v481
      %v483 = vrot.slane %v482, 2
      %v484 = vmax.f32 %v482, %v483
      %v485 = vrot.slane %v484, 1
      %v486 = vmax.f32 %v484, %v485
      %v487 = vmax.f32 %v463, %v465
      %v488 = vrot.slane %v487, 4
      %v489 = vmax.f32 %v487, %v488
      %v490 = vrot.slane %v489, 2
      %v491 = vmax.f32 %v489, %v490
      %v492 = vrot.slane %v491, 1
      %v493 = vmax.f32 %v491, %v492
      %v494 = vmax.f32 %v472, %v486
      %v495 = vmax.f32 %v479, %v493
      %496 = vrot.lane.b32.xlu0 %v494, 51
      %v497 = vpop.permute.xlu0 %496
      %498 = vrot.lane.b32.xlu0 %v495, 51
      %v499 = vpop.permute.xlu0 %498
      %v500 = vlaneseq
      %v501 = vand.u32 %v500, 127
      %vm502 = vcmp.lt.s32.totalorder %v501, 51
      %v503 = vsel %vm502, %v497, %v499
      %v504 = vsel %vm502, %v499, %v497
      %v505 = vld [vmem:[%s2] ss:$8 sm:$0x3]
      %v508 = vcombine.low %v504, %v503
      %v510 = vunpack.c.l.s4 1966171168
      %v511 = vunpack.c.0.s8 %v510
      %v512 = vlaneseq
      %v513 = vshrl.u32 %v512, 7
      %v514 = vsub.s32 %v511, %v513
      %v515 = vrot.slane %v508, %v514
      %v517 = vunpack.c.l.s4 1966171168
      %v518 = vunpack.c.0.s8 %v517
      %v519 = vlaneseq
      %v520 = vshrl.u32 %v519, 7
      %v521 = vsub.s32 %v518, %v520
      %v522 = vrot.slane %v515, %v521
      %v524 = vmul.f32 %v505, %v522
      %v525 = vadd.f32 %v524, 0.0
      %526 = vrot.lane.b32.xlu0 %v494, 50
      %v527 = vpop.permute.xlu0 %526
      %528 = vrot.lane.b32.xlu0 %v495, 50
      %v529 = vpop.permute.xlu0 %528
      %vm530 = vcmp.lt.s32.totalorder %v501, 50
      %v531 = vsel %vm530, %v527, %v529
      %v532 = vsel %vm530, %v529, %v527
      %s533 = scalar_lea.vmem %s2, 1
      %v534 = vld [vmem:[%s533] ss:$8 sm:$0x3]
      %v537 = vcombine.low %v532, %v531
      %v539 = vunpack.c.l.s4 1966171168
      %v540 = vunpack.c.0.s8 %v539
      %v541 = vlaneseq
      %v542 = vshrl.u32 %v541, 7
      %v543 = vsub.s32 %v540, %v542
      %v544 = vrot.slane %v537, %v543
      %v546 = vunpack.c.l.s4 1966171168
      %v547 = vunpack.c.0.s8 %v546
      %v548 = vlaneseq
      %v549 = vshrl.u32 %v548, 7
      %v550 = vsub.s32 %v547, %v549
      %v551 = vrot.slane %v544, %v550
      %v553 = vmul.f32 %v534, %v551
      %v554 = vadd.f32 %v525, %v553
      %555 = vrot.lane.b32.xlu0 %v494, 49
      %v556 = vpop.permute.xlu0 %555
      %557 = vrot.lane.b32.xlu0 %v495, 49
      %v558 = vpop.permute.xlu0 %557
      %vm559 = vcmp.lt.s32.totalorder %v501, 49
      %v560 = vsel %vm559, %v556, %v558
      %v561 = vsel %vm559, %v558, %v556
      %s562 = scalar_lea.vmem %s2, 2
      %v563 = vld [vmem:[%s562] ss:$8 sm:$0x3]
      %v566 = vcombine.low %v561, %v560
      %v568 = vunpack.c.l.s4 1966171168
      %v569 = vunpack.c.0.s8 %v568
      %v570 = vlaneseq
      %v571 = vshrl.u32 %v570, 7
      %v572 = vsub.s32 %v569, %v571
      %v573 = vrot.slane %v566, %v572
      %v575 = vunpack.c.l.s4 1966171168
      %v576 = vunpack.c.0.s8 %v575
      %v577 = vlaneseq
      %v578 = vshrl.u32 %v577, 7
      %v579 = vsub.s32 %v576, %v578
      %v580 = vrot.slane %v573, %v579
      %v582 = vmul.f32 %v563, %v580
      %v583 = vadd.f32 %v554, %v582
      %584 = vrot.lane.b32.xlu0 %v494, 48
      %v585 = vpop.permute.xlu0 %584
      %586 = vrot.lane.b32.xlu0 %v495, 48
      %v587 = vpop.permute.xlu0 %586
      %vm588 = vcmp.lt.s32.totalorder %v501, 48
      %v589 = vsel %vm588, %v585, %v587
      %v590 = vsel %vm588, %v587, %v585
      %s591 = scalar_lea.vmem %s2, 3
      %v592 = vld [vmem:[%s591] ss:$8 sm:$0x3]
      %v595 = vcombine.low %v590, %v589
      %v597 = vunpack.c.l.s4 1966171168
      %v598 = vunpack.c.0.s8 %v597
      %v599 = vlaneseq
      %v600 = vshrl.u32 %v599, 7
      %v601 = vsub.s32 %v598, %v600
      %v602 = vrot.slane %v595, %v601
      %v604 = vunpack.c.l.s4 1966171168
      %v605 = vunpack.c.0.s8 %v604
      %v606 = vlaneseq
      %v607 = vshrl.u32 %v606, 7
      %v608 = vsub.s32 %v605, %v607
      %v609 = vrot.slane %v602, %v608
      %v611 = vmul.f32 %v592, %v609
      %v612 = vadd.f32 %v583, %v611
      %613 = vrot.lane.b32.xlu0 %v494, 47
      %v614 = vpop.permute.xlu0 %613
      %615 = vrot.lane.b32.xlu0 %v495, 47
      %v616 = vpop.permute.xlu0 %615
      %vm617 = vcmp.lt.s32.totalorder %v501, 47
      %v618 = vsel %vm617, %v614, %v616
      %v619 = vsel %vm617, %v616, %v614
      %s620 = scalar_lea.vmem %s2, 4
      %v621 = vld [vmem:[%s620] ss:$8 sm:$0x3]
      %v624 = vcombine.low %v619, %v618
      %v626 = vunpack.c.l.s4 1966171168
      %v627 = vunpack.c.0.s8 %v626
      %v628 = vlaneseq
      %v629 = vshrl.u32 %v628, 7
      %v630 = vsub.s32 %v627, %v629
      %v631 = vrot.slane %v624, %v630
      %v633 = vunpack.c.l.s4 1966171168
      %v634 = vunpack.c.0.s8 %v633
      %v635 = vlaneseq
      %v636 = vshrl.u32 %v635, 7
      %v637 = vsub.s32 %v634, %v636
      %v638 = vrot.slane %v631, %v637
      %v640 = vmul.f32 %v621, %v638
      %v641 = vadd.f32 %v612, %v640
      %642 = vrot.lane.b32.xlu0 %v494, 46
      %v643 = vpop.permute.xlu0 %642
      %644 = vrot.lane.b32.xlu0 %v495, 46
      %v645 = vpop.permute.xlu0 %644
      %vm646 = vcmp.lt.s32.totalorder %v501, 46
      %v647 = vsel %vm646, %v643, %v645
      %v648 = vsel %vm646, %v645, %v643
      %s649 = scalar_lea.vmem %s2, 5
      %v650 = vld [vmem:[%s649] ss:$8 sm:$0x3]
      %v653 = vcombine.low %v648, %v647
      %v655 = vunpack.c.l.s4 1966171168
      %v656 = vunpack.c.0.s8 %v655
      %v657 = vlaneseq
      %v658 = vshrl.u32 %v657, 7
      %v659 = vsub.s32 %v656, %v658
      %v660 = vrot.slane %v653, %v659
      %v662 = vunpack.c.l.s4 1966171168
      %v663 = vunpack.c.0.s8 %v662
      %v664 = vlaneseq
      %v665 = vshrl.u32 %v664, 7
      %v666 = vsub.s32 %v663, %v665
      %v667 = vrot.slane %v660, %v666
      %v669 = vmul.f32 %v650, %v667
      %v670 = vadd.f32 %v641, %v669
      %671 = vrot.lane.b32.xlu0 %v494, 45
      %v672 = vpop.permute.xlu0 %671
      %673 = vrot.lane.b32.xlu0 %v495, 45
      %v674 = vpop.permute.xlu0 %673
      %vm675 = vcmp.lt.s32.totalorder %v501, 45
      %v676 = vsel %vm675, %v672, %v674
      %v677 = vsel %vm675, %v674, %v672
      %s678 = scalar_lea.vmem %s2, 6
      %v679 = vld [vmem:[%s678] ss:$8 sm:$0x3]
      %v682 = vcombine.low %v677, %v676
      %v684 = vunpack.c.l.s4 1966171168
      %v685 = vunpack.c.0.s8 %v684
      %v686 = vlaneseq
      %v687 = vshrl.u32 %v686, 7
      %v688 = vsub.s32 %v685, %v687
      %v689 = vrot.slane %v682, %v688
      %v691 = vunpack.c.l.s4 1966171168
      %v692 = vunpack.c.0.s8 %v691
      %v693 = vlaneseq
      %v694 = vshrl.u32 %v693, 7
      %v695 = vsub.s32 %v692, %v694
      %v696 = vrot.slane %v689, %v695
      %v698 = vmul.f32 %v679, %v696
      %v699 = vadd.f32 %v670, %v698
      %700 = vrot.lane.b32.xlu0 %v494, 35
      %v701 = vpop.permute.xlu0 %700
      %702 = vrot.lane.b32.xlu0 %v495, 35
      %v703 = vpop.permute.xlu0 %702
      %vm704 = vcmp.lt.s32.totalorder %v501, 35
      %v705 = vsel %vm704, %v701, %v703
      %v706 = vsel %vm704, %v703, %v701
      %s707 = scalar_lea.vmem %s2, 7
      %v708 = vld [vmem:[%s707] ss:$8 sm:$0x3]
      %v711 = vcombine.low %v706, %v705
      %v713 = vunpack.c.l.s4 1966171168
      %v714 = vunpack.c.0.s8 %v713
      %v715 = vlaneseq
      %v716 = vshrl.u32 %v715, 7
      %v717 = vsub.s32 %v714, %v716
      %v718 = vrot.slane %v711, %v717
      %v720 = vunpack.c.l.s4 1966171168
      %v721 = vunpack.c.0.s8 %v720
      %v722 = vlaneseq
      %v723 = vshrl.u32 %v722, 7
      %v724 = vsub.s32 %v721, %v723
      %v725 = vrot.slane %v718, %v724
      %v727 = vmul.f32 %v708, %v725
      %v728 = vadd.f32 %v699, %v727
      %729 = vrot.lane.b32.xlu0 %v494, 34
      %v730 = vpop.permute.xlu0 %729
      %731 = vrot.lane.b32.xlu0 %v495, 34
      %v732 = vpop.permute.xlu0 %731
      %vm733 = vcmp.lt.s32.totalorder %v501, 34
      %v734 = vsel %vm733, %v730, %v732
      %v735 = vsel %vm733, %v732, %v730
      %s736 = scalar_lea.vmem %s2, 16
      %v737 = vld [vmem:[%s736] ss:$8 sm:$0x3]
      %v740 = vcombine.low %v735, %v734
      %v742 = vunpack.c.l.s4 1966171168
      %v743 = vunpack.c.0.s8 %v742
      %v744 = vlaneseq
      %v745 = vshrl.u32 %v744, 7
      %v746 = vsub.s32 %v743, %v745
      %v747 = vrot.slane %v740, %v746
      %v749 = vunpack.c.l.s4 1966171168
      %v750 = vunpack.c.0.s8 %v749
      %v751 = vlaneseq
      %v752 = vshrl.u32 %v751, 7
      %v753 = vsub.s32 %v750, %v752
      %v754 = vrot.slane %v747, %v753
      %v756 = vmul.f32 %v737, %v754
      %v757 = vadd.f32 %v728, %v756
      %758 = vrot.lane.b32.xlu0 %v494, 33
      %v759 = vpop.permute.xlu0 %758
      %760 = vrot.lane.b32.xlu0 %v495, 33
      %v761 = vpop.permute.xlu0 %760
      %vm762 = vcmp.lt.s32.totalorder %v501, 33
      %v763 = vsel %vm762, %v759, %v761
      %v764 = vsel %vm762, %v761, %v759
      %s765 = scalar_lea.vmem %s2, 17
      %v766 = vld [vmem:[%s765] ss:$8 sm:$0x3]
      %v769 = vcombine.low %v764, %v763
      %v771 = vunpack.c.l.s4 1966171168
      %v772 = vunpack.c.0.s8 %v771
      %v773 = vlaneseq
      %v774 = vshrl.u32 %v773, 7
      %v775 = vsub.s32 %v772, %v774
      %v776 = vrot.slane %v769, %v775
      %v778 = vunpack.c.l.s4 1966171168
      %v779 = vunpack.c.0.s8 %v778
      %v780 = vlaneseq
      %v781 = vshrl.u32 %v780, 7
      %v782 = vsub.s32 %v779, %v781
      %v783 = vrot.slane %v776, %v782
      %v785 = vmul.f32 %v766, %v783
      %v786 = vadd.f32 %v757, %v785
      %787 = vrot.lane.b32.xlu0 %v494, 32
      %v788 = vpop.permute.xlu0 %787
      %789 = vrot.lane.b32.xlu0 %v495, 32
      %v790 = vpop.permute.xlu0 %789
      %vm791 = vcmp.lt.s32.totalorder %v501, 32
      %v792 = vsel %vm791, %v788, %v790
      %v793 = vsel %vm791, %v790, %v788
      %s794 = scalar_lea.vmem %s2, 18
      %v795 = vld [vmem:[%s794] ss:$8 sm:$0x3]
      %v798 = vcombine.low %v793, %v792
      %v800 = vunpack.c.l.s4 1966171168
      %v801 = vunpack.c.0.s8 %v800
      %v802 = vlaneseq
      %v803 = vshrl.u32 %v802, 7
      %v804 = vsub.s32 %v801, %v803
      %v805 = vrot.slane %v798, %v804
      %v807 = vunpack.c.l.s4 1966171168
      %v808 = vunpack.c.0.s8 %v807
      %v809 = vlaneseq
      %v810 = vshrl.u32 %v809, 7
      %v811 = vsub.s32 %v808, %v810
      %v812 = vrot.slane %v805, %v811
      %v814 = vmul.f32 %v795, %v812
      %v815 = vadd.f32 %v786, %v814
      %816 = vrot.lane.b32.xlu0 %v494, 31
      %v817 = vpop.permute.xlu0 %816
      %818 = vrot.lane.b32.xlu0 %v495, 31
      %v819 = vpop.permute.xlu0 %818
      %vm820 = vcmp.lt.s32.totalorder %v501, 31
      %v821 = vsel %vm820, %v817, %v819
      %v822 = vsel %vm820, %v819, %v817
      %s823 = scalar_lea.vmem %s2, 19
      %v824 = vld [vmem:[%s823] ss:$8 sm:$0x3]
      %v827 = vcombine.low %v822, %v821
      %v829 = vunpack.c.l.s4 1966171168
      %v830 = vunpack.c.0.s8 %v829
      %v831 = vlaneseq
      %v832 = vshrl.u32 %v831, 7
      %v833 = vsub.s32 %v830, %v832
      %v834 = vrot.slane %v827, %v833
      %v836 = vunpack.c.l.s4 1966171168
      %v837 = vunpack.c.0.s8 %v836
      %v838 = vlaneseq
      %v839 = vshrl.u32 %v838, 7
      %v840 = vsub.s32 %v837, %v839
      %v841 = vrot.slane %v834, %v840
      %v843 = vmul.f32 %v824, %v841
      %v844 = vadd.f32 %v815, %v843
      %845 = vrot.lane.b32.xlu0 %v494, 30
      %v846 = vpop.permute.xlu0 %845
      %847 = vrot.lane.b32.xlu0 %v495, 30
      %v848 = vpop.permute.xlu0 %847
      %vm849 = vcmp.lt.s32.totalorder %v501, 30
      %v850 = vsel %vm849, %v846, %v848
      %v851 = vsel %vm849, %v848, %v846
      %s852 = scalar_lea.vmem %s2, 20
      %v853 = vld [vmem:[%s852] ss:$8 sm:$0x3]
      %v856 = vcombine.low %v851, %v850
      %v858 = vunpack.c.l.s4 1966171168
      %v859 = vunpack.c.0.s8 %v858
      %v860 = vlaneseq
      %v861 = vshrl.u32 %v860, 7
      %v862 = vsub.s32 %v859, %v861
      %v863 = vrot.slane %v856, %v862
      %v865 = vunpack.c.l.s4 1966171168
      %v866 = vunpack.c.0.s8 %v865
      %v867 = vlaneseq
      %v868 = vshrl.u32 %v867, 7
      %v869 = vsub.s32 %v866, %v868
      %v870 = vrot.slane %v863, %v869
      %v872 = vmul.f32 %v853, %v870
      %v873 = vadd.f32 %v844, %v872
      %874 = vrot.lane.b32.xlu0 %v494, 29
      %v875 = vpop.permute.xlu0 %874
      %876 = vrot.lane.b32.xlu0 %v495, 29
      %v877 = vpop.permute.xlu0 %876
      %vm878 = vcmp.lt.s32.totalorder %v501, 29
      %v879 = vsel %vm878, %v875, %v877
      %v880 = vsel %vm878, %v877, %v875
      %s881 = scalar_lea.vmem %s2, 21
      %v882 = vld [vmem:[%s881] ss:$8 sm:$0x3]
      %v885 = vcombine.low %v880, %v879
      %v887 = vunpack.c.l.s4 1966171168
      %v888 = vunpack.c.0.s8 %v887
      %v889 = vlaneseq
      %v890 = vshrl.u32 %v889, 7
      %v891 = vsub.s32 %v888, %v890
      %v892 = vrot.slane %v885, %v891
      %v894 = vunpack.c.l.s4 1966171168
      %v895 = vunpack.c.0.s8 %v894
      %v896 = vlaneseq
      %v897 = vshrl.u32 %v896, 7
      %v898 = vsub.s32 %v895, %v897
      %v899 = vrot.slane %v892, %v898
      %v901 = vmul.f32 %v882, %v899
      %v902 = vadd.f32 %v873, %v901
      %903 = vrot.lane.b32.xlu0 %v494, 19
      %v904 = vpop.permute.xlu0 %903
      %905 = vrot.lane.b32.xlu0 %v495, 19
      %v906 = vpop.permute.xlu0 %905
      %vm907 = vcmp.lt.s32.totalorder %v501, 19
      %v908 = vsel %vm907, %v904, %v906
      %v909 = vsel %vm907, %v906, %v904
      %s910 = scalar_lea.vmem %s2, 22
      %v911 = vld [vmem:[%s910] ss:$8 sm:$0x3]
      %v914 = vcombine.low %v909, %v908
      %v916 = vunpack.c.l.s4 1966171168
      %v917 = vunpack.c.0.s8 %v916
      %v918 = vlaneseq
      %v919 = vshrl.u32 %v918, 7
      %v920 = vsub.s32 %v917, %v919
      %v921 = vrot.slane %v914, %v920
      %v923 = vunpack.c.l.s4 1966171168
      %v924 = vunpack.c.0.s8 %v923
      %v925 = vlaneseq
      %v926 = vshrl.u32 %v925, 7
      %v927 = vsub.s32 %v924, %v926
      %v928 = vrot.slane %v921, %v927
      %v930 = vmul.f32 %v911, %v928
      %v931 = vadd.f32 %v902, %v930
      %932 = vrot.lane.b32.xlu0 %v494, 18
      %v933 = vpop.permute.xlu0 %932
      %934 = vrot.lane.b32.xlu0 %v495, 18
      %v935 = vpop.permute.xlu0 %934
      %vm936 = vcmp.lt.s32.totalorder %v501, 18
      %v937 = vsel %vm936, %v933, %v935
      %v938 = vsel %vm936, %v935, %v933
      %s939 = scalar_lea.vmem %s2, 23
      %v940 = vld [vmem:[%s939] ss:$8 sm:$0x3]
      %v943 = vcombine.low %v938, %v937
      %v945 = vunpack.c.l.s4 1966171168
      %v946 = vunpack.c.0.s8 %v945
      %v947 = vlaneseq
      %v948 = vshrl.u32 %v947, 7
      %v949 = vsub.s32 %v946, %v948
      %v950 = vrot.slane %v943, %v949
      %v952 = vunpack.c.l.s4 1966171168
      %v953 = vunpack.c.0.s8 %v952
      %v954 = vlaneseq
      %v955 = vshrl.u32 %v954, 7
      %v956 = vsub.s32 %v953, %v955
      %v957 = vrot.slane %v950, %v956
      %v959 = vmul.f32 %v940, %v957
      %v960 = vadd.f32 %v931, %v959
      %961 = vrot.lane.b32.xlu0 %v494, 17
      %v962 = vpop.permute.xlu0 %961
      %963 = vrot.lane.b32.xlu0 %v495, 17
      %v964 = vpop.permute.xlu0 %963
      %vm965 = vcmp.lt.s32.totalorder %v501, 17
      %v966 = vsel %vm965, %v962, %v964
      %v967 = vsel %vm965, %v964, %v962
      %s968 = scalar_lea.vmem %s2, 32
      %v969 = vld [vmem:[%s968] ss:$8 sm:$0x3]
      %v972 = vcombine.low %v967, %v966
      %v974 = vunpack.c.l.s4 1966171168
      %v975 = vunpack.c.0.s8 %v974
      %v976 = vlaneseq
      %v977 = vshrl.u32 %v976, 7
      %v978 = vsub.s32 %v975, %v977
      %v979 = vrot.slane %v972, %v978
      %v981 = vunpack.c.l.s4 1966171168
      %v982 = vunpack.c.0.s8 %v981
      %v983 = vlaneseq
      %v984 = vshrl.u32 %v983, 7
      %v985 = vsub.s32 %v982, %v984
      %v986 = vrot.slane %v979, %v985
      %v988 = vmul.f32 %v969, %v986
      %v989 = vadd.f32 %v960, %v988
      %990 = vrot.lane.b32.xlu0 %v494, 16
      %v991 = vpop.permute.xlu0 %990
      %992 = vrot.lane.b32.xlu0 %v495, 16
      %v993 = vpop.permute.xlu0 %992
      %vm994 = vcmp.lt.s32.totalorder %v501, 16
      %v995 = vsel %vm994, %v991, %v993
      %v996 = vsel %vm994, %v993, %v991
      %s997 = scalar_lea.vmem %s2, 33
      %v998 = vld [vmem:[%s997] ss:$8 sm:$0x3]
      %v1001 = vcombine.low %v996, %v995
      %v1003 = vunpack.c.l.s4 1966171168
      %v1004 = vunpack.c.0.s8 %v1003
      %v1005 = vlaneseq
      %v1006 = vshrl.u32 %v1005, 7
      %v1007 = vsub.s32 %v1004, %v1006
      %v1008 = vrot.slane %v1001, %v1007
      %v1010 = vunpack.c.l.s4 1966171168
      %v1011 = vunpack.c.0.s8 %v1010
      %v1012 = vlaneseq
      %v1013 = vshrl.u32 %v1012, 7
      %v1014 = vsub.s32 %v1011, %v1013
      %v1015 = vrot.slane %v1008, %v1014
      %v1017 = vmul.f32 %v998, %v1015
      %v1018 = vadd.f32 %v989, %v1017
      %1019 = vrot.lane.b32.xlu0 %v494, 15
      %v1020 = vpop.permute.xlu0 %1019
      %1021 = vrot.lane.b32.xlu0 %v495, 15
      %v1022 = vpop.permute.xlu0 %1021
      %vm1023 = vcmp.lt.s32.totalorder %v501, 15
      %v1024 = vsel %vm1023, %v1020, %v1022
      %v1025 = vsel %vm1023, %v1022, %v1020
      %s1026 = scalar_lea.vmem %s2, 34
      %v1027 = vld [vmem:[%s1026] ss:$8 sm:$0x3]
      %v1030 = vcombine.low %v1025, %v1024
      %v1032 = vunpack.c.l.s4 1966171168
      %v1033 = vunpack.c.0.s8 %v1032
      %v1034 = vlaneseq
      %v1035 = vshrl.u32 %v1034, 7
      %v1036 = vsub.s32 %v1033, %v1035
      %v1037 = vrot.slane %v1030, %v1036
      %v1039 = vunpack.c.l.s4 1966171168
      %v1040 = vunpack.c.0.s8 %v1039
      %v1041 = vlaneseq
      %v1042 = vshrl.u32 %v1041, 7
      %v1043 = vsub.s32 %v1040, %v1042
      %v1044 = vrot.slane %v1037, %v1043
      %v1046 = vmul.f32 %v1027, %v1044
      %v1047 = vadd.f32 %v1018, %v1046
      %1048 = vrot.lane.b32.xlu0 %v494, 14
      %v1049 = vpop.permute.xlu0 %1048
      %1050 = vrot.lane.b32.xlu0 %v495, 14
      %v1051 = vpop.permute.xlu0 %1050
      %vm1052 = vcmp.lt.s32.totalorder %v501, 14
      %v1053 = vsel %vm1052, %v1049, %v1051
      %v1054 = vsel %vm1052, %v1051, %v1049
      %s1055 = scalar_lea.vmem %s2, 35
      %v1056 = vld [vmem:[%s1055] ss:$8 sm:$0x3]
      %v1059 = vcombine.low %v1054, %v1053
      %v1061 = vunpack.c.l.s4 1966171168
      %v1062 = vunpack.c.0.s8 %v1061
      %v1063 = vlaneseq
      %v1064 = vshrl.u32 %v1063, 7
      %v1065 = vsub.s32 %v1062, %v1064
      %v1066 = vrot.slane %v1059, %v1065
      %v1068 = vunpack.c.l.s4 1966171168
      %v1069 = vunpack.c.0.s8 %v1068
      %v1070 = vlaneseq
      %v1071 = vshrl.u32 %v1070, 7
      %v1072 = vsub.s32 %v1069, %v1071
      %v1073 = vrot.slane %v1066, %v1072
      %v1075 = vmul.f32 %v1056, %v1073
      %v1076 = vadd.f32 %v1047, %v1075
      %1077 = vrot.lane.b32.xlu0 %v494, 13
      %v1078 = vpop.permute.xlu0 %1077
      %1079 = vrot.lane.b32.xlu0 %v495, 13
      %v1080 = vpop.permute.xlu0 %1079
      %vm1081 = vcmp.lt.s32.totalorder %v501, 13
      %v1082 = vsel %vm1081, %v1078, %v1080
      %v1083 = vsel %vm1081, %v1080, %v1078
      %s1084 = scalar_lea.vmem %s2, 36
      %v1085 = vld [vmem:[%s1084] ss:$8 sm:$0x3]
      %v1088 = vcombine.low %v1083, %v1082
      %v1090 = vunpack.c.l.s4 1966171168
      %v1091 = vunpack.c.0.s8 %v1090
      %v1092 = vlaneseq
      %v1093 = vshrl.u32 %v1092, 7
      %v1094 = vsub.s32 %v1091, %v1093
      %v1095 = vrot.slane %v1088, %v1094
      %v1097 = vunpack.c.l.s4 1966171168
      %v1098 = vunpack.c.0.s8 %v1097
      %v1099 = vlaneseq
      %v1100 = vshrl.u32 %v1099, 7
      %v1101 = vsub.s32 %v1098, %v1100
      %v1102 = vrot.slane %v1095, %v1101
      %v1104 = vmul.f32 %v1085, %v1102
      %v1105 = vadd.f32 %v1076, %v1104
      %1106 = vrot.lane.b32.xlu0 %v494, 3
      %v1107 = vpop.permute.xlu0 %1106
      %1108 = vrot.lane.b32.xlu0 %v495, 3
      %v1109 = vpop.permute.xlu0 %1108
      %vm1110 = vcmp.lt.s32.totalorder %v501, 3
      %v1111 = vsel %vm1110, %v1107, %v1109
      %v1112 = vsel %vm1110, %v1109, %v1107
      %s1113 = scalar_lea.vmem %s2, 37
      %v1114 = vld [vmem:[%s1113] ss:$8 sm:$0x3]
      %v1117 = vcombine.low %v1112, %v1111
      %v1119 = vunpack.c.l.s4 1966171168
      %v1120 = vunpack.c.0.s8 %v1119
      %v1121 = vlaneseq
      %v1122 = vshrl.u32 %v1121, 7
      %v1123 = vsub.s32 %v1120, %v1122
      %v1124 = vrot.slane %v1117, %v1123
      %v1126 = vunpack.c.l.s4 1966171168
      %v1127 = vunpack.c.0.s8 %v1126
      %v1128 = vlaneseq
      %v1129 = vshrl.u32 %v1128, 7
      %v1130 = vsub.s32 %v1127, %v1129
      %v1131 = vrot.slane %v1124, %v1130
      %v1133 = vmul.f32 %v1114, %v1131
      %v1134 = vadd.f32 %v1105, %v1133
      %1135 = vrot.lane.b32.xlu0 %v494, 2
      %v1136 = vpop.permute.xlu0 %1135
      %1137 = vrot.lane.b32.xlu0 %v495, 2
      %v1138 = vpop.permute.xlu0 %1137
      %vm1139 = vcmp.lt.s32.totalorder %v501, 2
      %v1140 = vsel %vm1139, %v1136, %v1138
      %v1141 = vsel %vm1139, %v1138, %v1136
      %s1142 = scalar_lea.vmem %s2, 38
      %v1143 = vld [vmem:[%s1142] ss:$8 sm:$0x3]
      %v1146 = vcombine.low %v1141, %v1140
      %v1148 = vunpack.c.l.s4 1966171168
      %v1149 = vunpack.c.0.s8 %v1148
      %v1150 = vlaneseq
      %v1151 = vshrl.u32 %v1150, 7
      %v1152 = vsub.s32 %v1149, %v1151
      %v1153 = vrot.slane %v1146, %v1152
      %v1155 = vunpack.c.l.s4 1966171168
      %v1156 = vunpack.c.0.s8 %v1155
      %v1157 = vlaneseq
      %v1158 = vshrl.u32 %v1157, 7
      %v1159 = vsub.s32 %v1156, %v1158
      %v1160 = vrot.slane %v1153, %v1159
      %v1162 = vmul.f32 %v1143, %v1160
      %v1163 = vadd.f32 %v1134, %v1162
      %1164 = vrot.lane.b32.xlu0 %v494, 1
      %v1165 = vpop.permute.xlu0 %1164
      %1166 = vrot.lane.b32.xlu0 %v495, 1
      %v1167 = vpop.permute.xlu0 %1166
      %vm1168 = vcmp.lt.s32.totalorder %v501, 1
      %v1169 = vsel %vm1168, %v1165, %v1167
      %v1170 = vsel %vm1168, %v1167, %v1165
      %s1171 = scalar_lea.vmem %s2, 39
      %v1172 = vld [vmem:[%s1171] ss:$8 sm:$0x3]
      %v1175 = vcombine.low %v1170, %v1169
      %v1177 = vunpack.c.l.s4 1966171168
      %v1178 = vunpack.c.0.s8 %v1177
      %v1179 = vlaneseq
      %v1180 = vshrl.u32 %v1179, 7
      %v1181 = vsub.s32 %v1178, %v1180
      %v1182 = vrot.slane %v1175, %v1181
      %v1184 = vunpack.c.l.s4 1966171168
      %v1185 = vunpack.c.0.s8 %v1184
      %v1186 = vlaneseq
      %v1187 = vshrl.u32 %v1186, 7
      %v1188 = vsub.s32 %v1185, %v1187
      %v1189 = vrot.slane %v1182, %v1188
      %v1191 = vmul.f32 %v1172, %v1189
      %v1192 = vadd.f32 %v1163, %v1191
      %s1193 = scalar_lea.vmem %s2, 48
      %v1194 = vld [vmem:[%s1193] ss:$8 sm:$0x3]
      %v1197 = vcombine.low %v494, %v495
      %v1199 = vunpack.c.l.s4 1966171168
      %v1200 = vunpack.c.0.s8 %v1199
      %v1201 = vlaneseq
      %v1202 = vshrl.u32 %v1201, 7
      %v1203 = vsub.s32 %v1200, %v1202
      %v1204 = vrot.slane %v1197, %v1203
      %v1206 = vunpack.c.l.s4 1966171168
      %v1207 = vunpack.c.0.s8 %v1206
      %v1208 = vlaneseq
      %v1209 = vshrl.u32 %v1208, 7
      %v1210 = vsub.s32 %v1207, %v1209
      %v1211 = vrot.slane %v1204, %v1210
      %v1213 = vmul.f32 %v1194, %v1211
      %v1214 = vadd.f32 %v1192, %v1213
      %1215 = vrot.lane.b32.xlu0 %v494, 127
      %v1216 = vpop.permute.xlu0 %1215
      %1217 = vrot.lane.b32.xlu0 %v495, 127
      %v1218 = vpop.permute.xlu0 %1217
      %vm1219 = vcmp.lt.s32.totalorder %v501, 127
      %v1220 = vsel %vm1219, %v1216, %v1218
      %v1221 = vsel %vm1219, %v1218, %v1216
      %s1222 = scalar_lea.vmem %s2, 49
      %v1223 = vld [vmem:[%s1222] ss:$8 sm:$0x3]
      %v1226 = vcombine.low %v1220, %v1221
      %v1228 = vunpack.c.l.s4 1966171168
      %v1229 = vunpack.c.0.s8 %v1228
      %v1230 = vlaneseq
      %v1231 = vshrl.u32 %v1230, 7
      %v1232 = vsub.s32 %v1229, %v1231
      %v1233 = vrot.slane %v1226, %v1232
      %v1235 = vunpack.c.l.s4 1966171168
      %v1236 = vunpack.c.0.s8 %v1235
      %v1237 = vlaneseq
      %v1238 = vshrl.u32 %v1237, 7
      %v1239 = vsub.s32 %v1236, %v1238
      %v1240 = vrot.slane %v1233, %v1239
      %v1242 = vmul.f32 %v1223, %v1240
      %v1243 = vadd.f32 %v1214, %v1242
      %1244 = vrot.lane.b32.xlu0 %v494, 126
      %v1245 = vpop.permute.xlu0 %1244
      %1246 = vrot.lane.b32.xlu0 %v495, 126
      %v1247 = vpop.permute.xlu0 %1246
      %vm1248 = vcmp.lt.s32.totalorder %v501, 126
      %v1249 = vsel %vm1248, %v1245, %v1247
      %v1250 = vsel %vm1248, %v1247, %v1245
      %s1251 = scalar_lea.vmem %s2, 50
      %v1252 = vld [vmem:[%s1251] ss:$8 sm:$0x3]
      %v1255 = vcombine.low %v1249, %v1250
      %v1257 = vunpack.c.l.s4 1966171168
      %v1258 = vunpack.c.0.s8 %v1257
      %v1259 = vlaneseq
      %v1260 = vshrl.u32 %v1259, 7
      %v1261 = vsub.s32 %v1258, %v1260
      %v1262 = vrot.slane %v1255, %v1261
      %v1264 = vunpack.c.l.s4 1966171168
      %v1265 = vunpack.c.0.s8 %v1264
      %v1266 = vlaneseq
      %v1267 = vshrl.u32 %v1266, 7
      %v1268 = vsub.s32 %v1265, %v1267
      %v1269 = vrot.slane %v1262, %v1268
      %v1271 = vmul.f32 %v1252, %v1269
      %v1272 = vadd.f32 %v1243, %v1271
      %1273 = vrot.lane.b32.xlu0 %v494, 125
      %v1274 = vpop.permute.xlu0 %1273
      %1275 = vrot.lane.b32.xlu0 %v495, 125
      %v1276 = vpop.permute.xlu0 %1275
      %vm1277 = vcmp.lt.s32.totalorder %v501, 125
      %v1278 = vsel %vm1277, %v1274, %v1276
      %v1279 = vsel %vm1277, %v1276, %v1274
      %s1280 = scalar_lea.vmem %s2, 51
      %v1281 = vld [vmem:[%s1280] ss:$8 sm:$0x3]
      %v1284 = vcombine.low %v1278, %v1279
      %v1286 = vunpack.c.l.s4 1966171168
      %v1287 = vunpack.c.0.s8 %v1286
      %v1288 = vlaneseq
      %v1289 = vshrl.u32 %v1288, 7
      %v1290 = vsub.s32 %v1287, %v1289
      %v1291 = vrot.slane %v1284, %v1290
      %v1293 = vunpack.c.l.s4 1966171168
      %v1294 = vunpack.c.0.s8 %v1293
      %v1295 = vlaneseq
      %v1296 = vshrl.u32 %v1295, 7
      %v1297 = vsub.s32 %v1294, %v1296
      %v1298 = vrot.slane %v1291, %v1297
      %v1300 = vmul.f32 %v1281, %v1298
      %v1301 = vadd.f32 %v1272, %v1300
      %1302 = vrot.lane.b32.xlu0 %v494, 115
      %v1303 = vpop.permute.xlu0 %1302
      %1304 = vrot.lane.b32.xlu0 %v495, 115
      %v1305 = vpop.permute.xlu0 %1304
      %vm1306 = vcmp.lt.s32.totalorder %v501, 115
      %v1307 = vsel %vm1306, %v1303, %v1305
      %v1308 = vsel %vm1306, %v1305, %v1303
      %s1309 = scalar_lea.vmem %s2, 52
      %v1310 = vld [vmem:[%s1309] ss:$8 sm:$0x3]
      %v1313 = vcombine.low %v1307, %v1308
      %v1315 = vunpack.c.l.s4 1966171168
      %v1316 = vunpack.c.0.s8 %v1315
      %v1317 = vlaneseq
      %v1318 = vshrl.u32 %v1317, 7
      %v1319 = vsub.s32 %v1316, %v1318
      %v1320 = vrot.slane %v1313, %v1319
      %v1322 = vunpack.c.l.s4 1966171168
      %v1323 = vunpack.c.0.s8 %v1322
      %v1324 = vlaneseq
      %v1325 = vshrl.u32 %v1324, 7
      %v1326 = vsub.s32 %v1323, %v1325
      %v1327 = vrot.slane %v1320, %v1326
      %v1329 = vmul.f32 %v1310, %v1327
      %v1330 = vadd.f32 %v1301, %v1329
      %1331 = vrot.lane.b32.xlu0 %v494, 114
      %v1332 = vpop.permute.xlu0 %1331
      %1333 = vrot.lane.b32.xlu0 %v495, 114
      %v1334 = vpop.permute.xlu0 %1333
      %vm1335 = vcmp.lt.s32.totalorder %v501, 114
      %v1336 = vsel %vm1335, %v1332, %v1334
      %v1337 = vsel %vm1335, %v1334, %v1332
      %s1338 = scalar_lea.vmem %s2, 53
      %v1339 = vld [vmem:[%s1338] ss:$8 sm:$0x3]
      %v1342 = vcombine.low %v1336, %v1337
      %v1344 = vunpack.c.l.s4 1966171168
      %v1345 = vunpack.c.0.s8 %v1344
      %v1346 = vlaneseq
      %v1347 = vshrl.u32 %v1346, 7
      %v1348 = vsub.s32 %v1345, %v1347
      %v1349 = vrot.slane %v1342, %v1348
      %v1351 = vunpack.c.l.s4 1966171168
      %v1352 = vunpack.c.0.s8 %v1351
      %v1353 = vlaneseq
      %v1354 = vshrl.u32 %v1353, 7
      %v1355 = vsub.s32 %v1352, %v1354
      %v1356 = vrot.slane %v1349, %v1355
      %v1358 = vmul.f32 %v1339, %v1356
      %v1359 = vadd.f32 %v1330, %v1358
      %1360 = vrot.lane.b32.xlu0 %v494, 113
      %v1361 = vpop.permute.xlu0 %1360
      %1362 = vrot.lane.b32.xlu0 %v495, 113
      %v1363 = vpop.permute.xlu0 %1362
      %vm1364 = vcmp.lt.s32.totalorder %v501, 113
      %v1365 = vsel %vm1364, %v1361, %v1363
      %v1366 = vsel %vm1364, %v1363, %v1361
      %s1367 = scalar_lea.vmem %s2, 54
      %v1368 = vld [vmem:[%s1367] ss:$8 sm:$0x3]
      %v1371 = vcombine.low %v1365, %v1366
      %v1373 = vunpack.c.l.s4 1966171168
      %v1374 = vunpack.c.0.s8 %v1373
      %v1375 = vlaneseq
      %v1376 = vshrl.u32 %v1375, 7
      %v1377 = vsub.s32 %v1374, %v1376
      %v1378 = vrot.slane %v1371, %v1377
      %v1380 = vunpack.c.l.s4 1966171168
      %v1381 = vunpack.c.0.s8 %v1380
      %v1382 = vlaneseq
      %v1383 = vshrl.u32 %v1382, 7
      %v1384 = vsub.s32 %v1381, %v1383
      %v1385 = vrot.slane %v1378, %v1384
      %v1387 = vmul.f32 %v1368, %v1385
      %v1388 = vadd.f32 %v1359, %v1387
      %1389 = vrot.lane.b32.xlu0 %v494, 112
      %v1390 = vpop.permute.xlu0 %1389
      %1391 = vrot.lane.b32.xlu0 %v495, 112
      %v1392 = vpop.permute.xlu0 %1391
      %vm1393 = vcmp.lt.s32.totalorder %v501, 112
      %v1394 = vsel %vm1393, %v1390, %v1392
      %v1395 = vsel %vm1393, %v1392, %v1390
      %s1396 = scalar_lea.vmem %s2, 55
      %v1397 = vld [vmem:[%s1396] ss:$8 sm:$0x3]
      %v1400 = vcombine.low %v1394, %v1395
      %v1402 = vunpack.c.l.s4 1966171168
      %v1403 = vunpack.c.0.s8 %v1402
      %v1404 = vlaneseq
      %v1405 = vshrl.u32 %v1404, 7
      %v1406 = vsub.s32 %v1403, %v1405
      %v1407 = vrot.slane %v1400, %v1406
      %v1409 = vunpack.c.l.s4 1966171168
      %v1410 = vunpack.c.0.s8 %v1409
      %v1411 = vlaneseq
      %v1412 = vshrl.u32 %v1411, 7
      %v1413 = vsub.s32 %v1410, %v1412
      %v1414 = vrot.slane %v1407, %v1413
      %v1416 = vmul.f32 %v1397, %v1414
      %v1417 = vadd.f32 %v1388, %v1416
      %1418 = vrot.lane.b32.xlu0 %v494, 111
      %v1419 = vpop.permute.xlu0 %1418
      %1420 = vrot.lane.b32.xlu0 %v495, 111
      %v1421 = vpop.permute.xlu0 %1420
      %vm1422 = vcmp.lt.s32.totalorder %v501, 111
      %v1423 = vsel %vm1422, %v1419, %v1421
      %v1424 = vsel %vm1422, %v1421, %v1419
      %s1425 = scalar_lea.vmem %s2, 64
      %v1426 = vld [vmem:[%s1425] ss:$8 sm:$0x3]
      %v1429 = vcombine.low %v1423, %v1424
      %v1431 = vunpack.c.l.s4 1966171168
      %v1432 = vunpack.c.0.s8 %v1431
      %v1433 = vlaneseq
      %v1434 = vshrl.u32 %v1433, 7
      %v1435 = vsub.s32 %v1432, %v1434
      %v1436 = vrot.slane %v1429, %v1435
      %v1438 = vunpack.c.l.s4 1966171168
      %v1439 = vunpack.c.0.s8 %v1438
      %v1440 = vlaneseq
      %v1441 = vshrl.u32 %v1440, 7
      %v1442 = vsub.s32 %v1439, %v1441
      %v1443 = vrot.slane %v1436, %v1442
      %v1445 = vmul.f32 %v1426, %v1443
      %v1446 = vadd.f32 %v1417, %v1445
      %1447 = vrot.lane.b32.xlu0 %v494, 110
      %v1448 = vpop.permute.xlu0 %1447
      %1449 = vrot.lane.b32.xlu0 %v495, 110
      %v1450 = vpop.permute.xlu0 %1449
      %vm1451 = vcmp.lt.s32.totalorder %v501, 110
      %v1452 = vsel %vm1451, %v1448, %v1450
      %v1453 = vsel %vm1451, %v1450, %v1448
      %s1454 = scalar_lea.vmem %s2, 65
      %v1455 = vld [vmem:[%s1454] ss:$8 sm:$0x3]
      %v1458 = vcombine.low %v1452, %v1453
      %v1460 = vunpack.c.l.s4 1966171168
      %v1461 = vunpack.c.0.s8 %v1460
      %v1462 = vlaneseq
      %v1463 = vshrl.u32 %v1462, 7
      %v1464 = vsub.s32 %v1461, %v1463
      %v1465 = vrot.slane %v1458, %v1464
      %v1467 = vunpack.c.l.s4 1966171168
      %v1468 = vunpack.c.0.s8 %v1467
      %v1469 = vlaneseq
      %v1470 = vshrl.u32 %v1469, 7
      %v1471 = vsub.s32 %v1468, %v1470
      %v1472 = vrot.slane %v1465, %v1471
      %v1474 = vmul.f32 %v1455, %v1472
      %v1475 = vadd.f32 %v1446, %v1474
      %1476 = vrot.lane.b32.xlu0 %v494, 109
      %v1477 = vpop.permute.xlu0 %1476
      %1478 = vrot.lane.b32.xlu0 %v495, 109
      %v1479 = vpop.permute.xlu0 %1478
      %vm1480 = vcmp.lt.s32.totalorder %v501, 109
      %v1481 = vsel %vm1480, %v1477, %v1479
      %v1482 = vsel %vm1480, %v1479, %v1477
      %s1483 = scalar_lea.vmem %s2, 66
      %v1484 = vld [vmem:[%s1483] ss:$8 sm:$0x3]
      %v1487 = vcombine.low %v1481, %v1482
      %v1489 = vunpack.c.l.s4 1966171168
      %v1490 = vunpack.c.0.s8 %v1489
      %v1491 = vlaneseq
      %v1492 = vshrl.u32 %v1491, 7
      %v1493 = vsub.s32 %v1490, %v1492
      %v1494 = vrot.slane %v1487, %v1493
      %v1496 = vunpack.c.l.s4 1966171168
      %v1497 = vunpack.c.0.s8 %v1496
      %v1498 = vlaneseq
      %v1499 = vshrl.u32 %v1498, 7
      %v1500 = vsub.s32 %v1497, %v1499
      %v1501 = vrot.slane %v1494, %v1500
      %v1503 = vmul.f32 %v1484, %v1501
      %v1504 = vadd.f32 %v1475, %v1503
      %1505 = vrot.lane.b32.xlu0 %v494, 99
      %v1506 = vpop.permute.xlu0 %1505
      %1507 = vrot.lane.b32.xlu0 %v495, 99
      %v1508 = vpop.permute.xlu0 %1507
      %vm1509 = vcmp.lt.s32.totalorder %v501, 99
      %v1510 = vsel %vm1509, %v1506, %v1508
      %v1511 = vsel %vm1509, %v1508, %v1506
      %s1512 = scalar_lea.vmem %s2, 67
      %v1513 = vld [vmem:[%s1512] ss:$8 sm:$0x3]
      %v1516 = vcombine.low %v1510, %v1511
      %v1518 = vunpack.c.l.s4 1966171168
      %v1519 = vunpack.c.0.s8 %v1518
      %v1520 = vlaneseq
      %v1521 = vshrl.u32 %v1520, 7
      %v1522 = vsub.s32 %v1519, %v1521
      %v1523 = vrot.slane %v1516, %v1522
      %v1525 = vunpack.c.l.s4 1966171168
      %v1526 = vunpack.c.0.s8 %v1525
      %v1527 = vlaneseq
      %v1528 = vshrl.u32 %v1527, 7
      %v1529 = vsub.s32 %v1526, %v1528
      %v1530 = vrot.slane %v1523, %v1529
      %v1532 = vmul.f32 %v1513, %v1530
      %v1533 = vadd.f32 %v1504, %v1532
      %1534 = vrot.lane.b32.xlu0 %v494, 98
      %v1535 = vpop.permute.xlu0 %1534
      %1536 = vrot.lane.b32.xlu0 %v495, 98
      %v1537 = vpop.permute.xlu0 %1536
      %vm1538 = vcmp.lt.s32.totalorder %v501, 98
      %v1539 = vsel %vm1538, %v1535, %v1537
      %v1540 = vsel %vm1538, %v1537, %v1535
      %s1541 = scalar_lea.vmem %s2, 68
      %v1542 = vld [vmem:[%s1541] ss:$8 sm:$0x3]
      %v1545 = vcombine.low %v1539, %v1540
      %v1547 = vunpack.c.l.s4 1966171168
      %v1548 = vunpack.c.0.s8 %v1547
      %v1549 = vlaneseq
      %v1550 = vshrl.u32 %v1549, 7
      %v1551 = vsub.s32 %v1548, %v1550
      %v1552 = vrot.slane %v1545, %v1551
      %v1554 = vunpack.c.l.s4 1966171168
      %v1555 = vunpack.c.0.s8 %v1554
      %v1556 = vlaneseq
      %v1557 = vshrl.u32 %v1556, 7
      %v1558 = vsub.s32 %v1555, %v1557
      %v1559 = vrot.slane %v1552, %v1558
      %v1561 = vmul.f32 %v1542, %v1559
      %v1562 = vadd.f32 %v1533, %v1561
      %1563 = vrot.lane.b32.xlu0 %v494, 97
      %v1564 = vpop.permute.xlu0 %1563
      %1565 = vrot.lane.b32.xlu0 %v495, 97
      %v1566 = vpop.permute.xlu0 %1565
      %vm1567 = vcmp.lt.s32.totalorder %v501, 97
      %v1568 = vsel %vm1567, %v1564, %v1566
      %v1569 = vsel %vm1567, %v1566, %v1564
      %s1570 = scalar_lea.vmem %s2, 69
      %v1571 = vld [vmem:[%s1570] ss:$8 sm:$0x3]
      %v1574 = vcombine.low %v1568, %v1569
      %v1576 = vunpack.c.l.s4 1966171168
      %v1577 = vunpack.c.0.s8 %v1576
      %v1578 = vlaneseq
      %v1579 = vshrl.u32 %v1578, 7
      %v1580 = vsub.s32 %v1577, %v1579
      %v1581 = vrot.slane %v1574, %v1580
      %v1583 = vunpack.c.l.s4 1966171168
      %v1584 = vunpack.c.0.s8 %v1583
      %v1585 = vlaneseq
      %v1586 = vshrl.u32 %v1585, 7
      %v1587 = vsub.s32 %v1584, %v1586
      %v1588 = vrot.slane %v1581, %v1587
      %v1590 = vmul.f32 %v1571, %v1588
      %v1591 = vadd.f32 %v1562, %v1590
      %1592 = vrot.lane.b32.xlu0 %v494, 96
      %v1593 = vpop.permute.xlu0 %1592
      %1594 = vrot.lane.b32.xlu0 %v495, 96
      %v1595 = vpop.permute.xlu0 %1594
      %vm1596 = vcmp.lt.s32.totalorder %v501, 96
      %v1597 = vsel %vm1596, %v1593, %v1595
      %v1598 = vsel %vm1596, %v1595, %v1593
      %s1599 = scalar_lea.vmem %s2, 70
      %v1600 = vld [vmem:[%s1599] ss:$8 sm:$0x3]
      %v1603 = vcombine.low %v1597, %v1598
      %v1605 = vunpack.c.l.s4 1966171168
      %v1606 = vunpack.c.0.s8 %v1605
      %v1607 = vlaneseq
      %v1608 = vshrl.u32 %v1607, 7
      %v1609 = vsub.s32 %v1606, %v1608
      %v1610 = vrot.slane %v1603, %v1609
      %v1612 = vunpack.c.l.s4 1966171168
      %v1613 = vunpack.c.0.s8 %v1612
      %v1614 = vlaneseq
      %v1615 = vshrl.u32 %v1614, 7
      %v1616 = vsub.s32 %v1613, %v1615
      %v1617 = vrot.slane %v1610, %v1616
      %v1619 = vmul.f32 %v1600, %v1617
      %v1620 = vadd.f32 %v1591, %v1619
      %1621 = vrot.lane.b32.xlu0 %v494, 95
      %v1622 = vpop.permute.xlu0 %1621
      %1623 = vrot.lane.b32.xlu0 %v495, 95
      %v1624 = vpop.permute.xlu0 %1623
      %vm1625 = vcmp.lt.s32.totalorder %v501, 95
      %v1626 = vsel %vm1625, %v1622, %v1624
      %v1627 = vsel %vm1625, %v1624, %v1622
      %s1628 = scalar_lea.vmem %s2, 71
      %v1629 = vld [vmem:[%s1628] ss:$8 sm:$0x3]
      %v1632 = vcombine.low %v1626, %v1627
      %v1634 = vunpack.c.l.s4 1966171168
      %v1635 = vunpack.c.0.s8 %v1634
      %v1636 = vlaneseq
      %v1637 = vshrl.u32 %v1636, 7
      %v1638 = vsub.s32 %v1635, %v1637
      %v1639 = vrot.slane %v1632, %v1638
      %v1641 = vunpack.c.l.s4 1966171168
      %v1642 = vunpack.c.0.s8 %v1641
      %v1643 = vlaneseq
      %v1644 = vshrl.u32 %v1643, 7
      %v1645 = vsub.s32 %v1642, %v1644
      %v1646 = vrot.slane %v1639, %v1645
      %v1648 = vmul.f32 %v1629, %v1646
      %v1649 = vadd.f32 %v1620, %v1648
      %1650 = vrot.lane.b32.xlu0 %v494, 94
      %v1651 = vpop.permute.xlu0 %1650
      %1652 = vrot.lane.b32.xlu0 %v495, 94
      %v1653 = vpop.permute.xlu0 %1652
      %vm1654 = vcmp.lt.s32.totalorder %v501, 94
      %v1655 = vsel %vm1654, %v1651, %v1653
      %v1656 = vsel %vm1654, %v1653, %v1651
      %s1657 = scalar_lea.vmem %s2, 80
      %v1658 = vld [vmem:[%s1657] ss:$8 sm:$0x3]
      %v1661 = vcombine.low %v1655, %v1656
      %v1663 = vunpack.c.l.s4 1966171168
      %v1664 = vunpack.c.0.s8 %v1663
      %v1665 = vlaneseq
      %v1666 = vshrl.u32 %v1665, 7
      %v1667 = vsub.s32 %v1664, %v1666
      %v1668 = vrot.slane %v1661, %v1667
      %v1670 = vunpack.c.l.s4 1966171168
      %v1671 = vunpack.c.0.s8 %v1670
      %v1672 = vlaneseq
      %v1673 = vshrl.u32 %v1672, 7
      %v1674 = vsub.s32 %v1671, %v1673
      %v1675 = vrot.slane %v1668, %v1674
      %v1677 = vmul.f32 %v1658, %v1675
      %v1678 = vadd.f32 %v1649, %v1677
      %1679 = vrot.lane.b32.xlu0 %v494, 93
      %v1680 = vpop.permute.xlu0 %1679
      %1681 = vrot.lane.b32.xlu0 %v495, 93
      %v1682 = vpop.permute.xlu0 %1681
      %vm1683 = vcmp.lt.s32.totalorder %v501, 93
      %v1684 = vsel %vm1683, %v1680, %v1682
      %v1685 = vsel %vm1683, %v1682, %v1680
      %s1686 = scalar_lea.vmem %s2, 81
      %v1687 = vld [vmem:[%s1686] ss:$8 sm:$0x3]
      %v1690 = vcombine.low %v1684, %v1685
      %v1692 = vunpack.c.l.s4 1966171168
      %v1693 = vunpack.c.0.s8 %v1692
      %v1694 = vlaneseq
      %v1695 = vshrl.u32 %v1694, 7
      %v1696 = vsub.s32 %v1693, %v1695
      %v1697 = vrot.slane %v1690, %v1696
      %v1699 = vunpack.c.l.s4 1966171168
      %v1700 = vunpack.c.0.s8 %v1699
      %v1701 = vlaneseq
      %v1702 = vshrl.u32 %v1701, 7
      %v1703 = vsub.s32 %v1700, %v1702
      %v1704 = vrot.slane %v1697, %v1703
      %v1706 = vmul.f32 %v1687, %v1704
      %v1707 = vadd.f32 %v1678, %v1706
      %1708 = vrot.lane.b32.xlu0 %v494, 83
      %v1709 = vpop.permute.xlu0 %1708
      %1710 = vrot.lane.b32.xlu0 %v495, 83
      %v1711 = vpop.permute.xlu0 %1710
      %vm1712 = vcmp.lt.s32.totalorder %v501, 83
      %v1713 = vsel %vm1712, %v1709, %v1711
      %v1714 = vsel %vm1712, %v1711, %v1709
      %s1715 = scalar_lea.vmem %s2, 82
      %v1716 = vld [vmem:[%s1715] ss:$8 sm:$0x3]
      %v1719 = vcombine.low %v1713, %v1714
      %v1721 = vunpack.c.l.s4 1966171168
      %v1722 = vunpack.c.0.s8 %v1721
      %v1723 = vlaneseq
      %v1724 = vshrl.u32 %v1723, 7
      %v1725 = vsub.s32 %v1722, %v1724
      %v1726 = vrot.slane %v1719, %v1725
      %v1728 = vunpack.c.l.s4 1966171168
      %v1729 = vunpack.c.0.s8 %v1728
      %v1730 = vlaneseq
      %v1731 = vshrl.u32 %v1730, 7
      %v1732 = vsub.s32 %v1729, %v1731
      %v1733 = vrot.slane %v1726, %v1732
      %v1735 = vmul.f32 %v1716, %v1733
      %v1736 = vadd.f32 %v1707, %v1735
      %1737 = vrot.lane.b32.xlu0 %v494, 82
      %v1738 = vpop.permute.xlu0 %1737
      %1739 = vrot.lane.b32.xlu0 %v495, 82
      %v1740 = vpop.permute.xlu0 %1739
      %vm1741 = vcmp.lt.s32.totalorder %v501, 82
      %v1742 = vsel %vm1741, %v1738, %v1740
      %v1743 = vsel %vm1741, %v1740, %v1738
      %s1744 = scalar_lea.vmem %s2, 83
      %v1745 = vld [vmem:[%s1744] ss:$8 sm:$0x3]
      %v1748 = vcombine.low %v1742, %v1743
      %v1750 = vunpack.c.l.s4 1966171168
      %v1751 = vunpack.c.0.s8 %v1750
      %v1752 = vlaneseq
      %v1753 = vshrl.u32 %v1752, 7
      %v1754 = vsub.s32 %v1751, %v1753
      %v1755 = vrot.slane %v1748, %v1754
      %v1757 = vunpack.c.l.s4 1966171168
      %v1758 = vunpack.c.0.s8 %v1757
      %v1759 = vlaneseq
      %v1760 = vshrl.u32 %v1759, 7
      %v1761 = vsub.s32 %v1758, %v1760
      %v1762 = vrot.slane %v1755, %v1761
      %v1764 = vmul.f32 %v1745, %v1762
      %v1765 = vadd.f32 %v1736, %v1764
      %1766 = vrot.lane.b32.xlu0 %v494, 81
      %v1767 = vpop.permute.xlu0 %1766
      %1768 = vrot.lane.b32.xlu0 %v495, 81
      %v1769 = vpop.permute.xlu0 %1768
      %vm1770 = vcmp.lt.s32.totalorder %v501, 81
      %v1771 = vsel %vm1770, %v1767, %v1769
      %v1772 = vsel %vm1770, %v1769, %v1767
      %s1773 = scalar_lea.vmem %s2, 84
      %v1774 = vld [vmem:[%s1773] ss:$8 sm:$0x3]
      %v1777 = vcombine.low %v1771, %v1772
      %v1779 = vunpack.c.l.s4 1966171168
      %v1780 = vunpack.c.0.s8 %v1779
      %v1781 = vlaneseq
      %v1782 = vshrl.u32 %v1781, 7
      %v1783 = vsub.s32 %v1780, %v1782
      %v1784 = vrot.slane %v1777, %v1783
      %v1786 = vunpack.c.l.s4 1966171168
      %v1787 = vunpack.c.0.s8 %v1786
      %v1788 = vlaneseq
      %v1789 = vshrl.u32 %v1788, 7
      %v1790 = vsub.s32 %v1787, %v1789
      %v1791 = vrot.slane %v1784, %v1790
      %v1793 = vmul.f32 %v1774, %v1791
      %v1794 = vadd.f32 %v1765, %v1793
      %1795 = vrot.lane.b32.xlu0 %v494, 80
      %v1796 = vpop.permute.xlu0 %1795
      %1797 = vrot.lane.b32.xlu0 %v495, 80
      %v1798 = vpop.permute.xlu0 %1797
      %vm1799 = vcmp.lt.s32.totalorder %v501, 80
      %v1800 = vsel %vm1799, %v1796, %v1798
      %v1801 = vsel %vm1799, %v1798, %v1796
      %s1802 = scalar_lea.vmem %s2, 85
      %v1803 = vld [vmem:[%s1802] ss:$8 sm:$0x3]
      %v1806 = vcombine.low %v1800, %v1801
      %v1808 = vunpack.c.l.s4 1966171168
      %v1809 = vunpack.c.0.s8 %v1808
      %v1810 = vlaneseq
      %v1811 = vshrl.u32 %v1810, 7
      %v1812 = vsub.s32 %v1809, %v1811
      %v1813 = vrot.slane %v1806, %v1812
      %v1815 = vunpack.c.l.s4 1966171168
      %v1816 = vunpack.c.0.s8 %v1815
      %v1817 = vlaneseq
      %v1818 = vshrl.u32 %v1817, 7
      %v1819 = vsub.s32 %v1816, %v1818
      %v1820 = vrot.slane %v1813, %v1819
      %v1822 = vmul.f32 %v1803, %v1820
      %v1823 = vadd.f32 %v1794, %v1822
      %1824 = vrot.lane.b32.xlu0 %v494, 79
      %v1825 = vpop.permute.xlu0 %1824
      %1826 = vrot.lane.b32.xlu0 %v495, 79
      %v1827 = vpop.permute.xlu0 %1826
      %vm1828 = vcmp.lt.s32.totalorder %v501, 79
      %v1829 = vsel %vm1828, %v1825, %v1827
      %v1830 = vsel %vm1828, %v1827, %v1825
      %s1831 = scalar_lea.vmem %s2, 86
      %v1832 = vld [vmem:[%s1831] ss:$8 sm:$0x3]
      %v1835 = vcombine.low %v1829, %v1830
      %v1837 = vunpack.c.l.s4 1966171168
      %v1838 = vunpack.c.0.s8 %v1837
      %v1839 = vlaneseq
      %v1840 = vshrl.u32 %v1839, 7
      %v1841 = vsub.s32 %v1838, %v1840
      %v1842 = vrot.slane %v1835, %v1841
      %v1844 = vunpack.c.l.s4 1966171168
      %v1845 = vunpack.c.0.s8 %v1844
      %v1846 = vlaneseq
      %v1847 = vshrl.u32 %v1846, 7
      %v1848 = vsub.s32 %v1845, %v1847
      %v1849 = vrot.slane %v1842, %v1848
      %v1851 = vmul.f32 %v1832, %v1849
      %v1852 = vadd.f32 %v1823, %v1851
      %1853 = vrot.lane.b32.xlu0 %v494, 78
      %v1854 = vpop.permute.xlu0 %1853
      %1855 = vrot.lane.b32.xlu0 %v495, 78
      %v1856 = vpop.permute.xlu0 %1855
      %vm1857 = vcmp.lt.s32.totalorder %v501, 78
      %v1858 = vsel %vm1857, %v1854, %v1856
      %v1859 = vsel %vm1857, %v1856, %v1854
      %s1860 = scalar_lea.vmem %s2, 87
      %v1861 = vld [vmem:[%s1860] ss:$8 sm:$0x3]
      %v1864 = vcombine.low %v1858, %v1859
      %v1866 = vunpack.c.l.s4 1966171168
      %v1867 = vunpack.c.0.s8 %v1866
      %v1868 = vlaneseq
      %v1869 = vshrl.u32 %v1868, 7
      %v1870 = vsub.s32 %v1867, %v1869
      %v1871 = vrot.slane %v1864, %v1870
      %v1873 = vunpack.c.l.s4 1966171168
      %v1874 = vunpack.c.0.s8 %v1873
      %v1875 = vlaneseq
      %v1876 = vshrl.u32 %v1875, 7
      %v1877 = vsub.s32 %v1874, %v1876
      %v1878 = vrot.slane %v1871, %v1877
      %v1880 = vmul.f32 %v1861, %v1878
      %v1881 = vadd.f32 %v1852, %v1880
      %1882 = vrot.lane.b32.xlu0 %v494, 77
      %v1883 = vpop.permute.xlu0 %1882
      %1884 = vrot.lane.b32.xlu0 %v495, 77
      %v1885 = vpop.permute.xlu0 %1884
      %vm1886 = vcmp.lt.s32.totalorder %v501, 77
      %v1887 = vsel %vm1886, %v1883, %v1885
      %v1888 = vsel %vm1886, %v1885, %v1883
      %s1889 = scalar_lea.vmem %s2, 96
      %v1890 = vld [vmem:[%s1889] ss:$8 sm:$0x3]
      %v1893 = vcombine.low %v1887, %v1888
      %v1895 = vunpack.c.l.s4 1966171168
      %v1896 = vunpack.c.0.s8 %v1895
      %v1897 = vlaneseq
      %v1898 = vshrl.u32 %v1897, 7
      %v1899 = vsub.s32 %v1896, %v1898
      %v1900 = vrot.slane %v1893, %v1899
      %v1902 = vunpack.c.l.s4 1966171168
      %v1903 = vunpack.c.0.s8 %v1902
      %v1904 = vlaneseq
      %v1905 = vshrl.u32 %v1904, 7
      %v1906 = vsub.s32 %v1903, %v1905
      %v1907 = vrot.slane %v1900, %v1906
      %v1909 = vmul.f32 %v1890, %v1907
      %v1910 = vadd.f32 %v1881, %v1909
      %v1911 = vsub.f32 0.0, %v1910
      %v1912 = vmul.f32 %v1911, 1.442695
      %v1913 = vpow.pop %v1912
      %v1914 = vadd.f32 %v1913, 1.0
      %v1915 = vrcp.pop %v1914
      %v1916 = vmul.f32 1.0, %v1915
      %v1917 = vstv %s436
      %v1918 = vmul.f32 %v1917, %v1916
      %v1919 = vstv %s437
      %v1920 = vadd.f32 %v1918, %v1919
      %v1922 = vlaneseq
      %v1923 = vshrl.u32 %v1922, 7
      %v1924 = vsub.s32 0, %v1923
      %v1925 = vrot.slane %v1920, %v1924
      %v1926 = vlaneseq
      %v1927 = vshrl.u32 %v1926, 7
      %v1928 = vsub.s32 1, %v1927
      %v1929 = vrot.slane %v1920, %v1928
      %v1932 = vmul.f32 %v458, %v1925
      %v1933 = vmul.f32 %v459, %v1929
      %v1934 = vmul.f32 %v460, %v1925
      %v1935 = vmul.f32 %v461, %v1929
      %v1936 = vmul.f32 %v462, %v1925
      %v1937 = vmul.f32 %v463, %v1929
      %v1938 = vmul.f32 %v464, %v1925
      %v1939 = vmul.f32 %v465, %v1929
      %v1940 = vmax.f32 %v1932, %v1933
      %1941 = vmax.xlane.f32.xlu0 %v1940
      %v1942 = vpop.xlane.xlu0 %1941
      %v1943 = vmax.f32 %v1934, %v1935
      %1944 = vmax.xlane.f32.xlu0 %v1943
      %v1945 = vpop.xlane.xlu0 %1944
      %v1946 = vmax.f32 %v1936, %v1937
      %1947 = vmax.xlane.f32.xlu0 %v1946
      %v1948 = vpop.xlane.xlu0 %1947
      %v1949 = vmax.f32 %v1938, %v1939
      %1950 = vmax.xlane.f32.xlu0 %v1949
      %v1951 = vpop.xlane.xlu0 %1950
      %vm1952 = vcmask 130048
      %v1954 = vsel %vm1952, %v445, 0
      %1956 = vmatprep.subr.mxu0 0.0
      %1957 = vmatpush1.msra.mxu0 0.0
      %1958 = vmatprep.subr.mxu0 0.0
      %1959 = vmatpush1.msra.mxu0 0.0
      %1960 = vmatprep.subr.mxu0 0.0
      %1961 = vmatpush1.msra.mxu0 0.0
      %1962 = vmatprep.subr.mxu0 0.0
      %1963 = vmatpush1.msra.mxu0 0.0
      %1964 = vmatprep.subr.mxu0 0.0
      %1965 = vmatpush1.msra.mxu0 0.0
      %1966 = vmatprep.subr.mxu0 0.0
      %1967 = vmatpush1.msra.mxu0 0.0
      %1968 = vmatprep.subr.mxu0 0.0
      %1969 = vmatpush1.msra.mxu0 0.0
      %1970 = vmatprep.subr.mxu0 0.0
      %1971 = vmatpush1.msra.mxu0 0.0
      %1972 = vmatprep.subr.mxu0 0.0
      %1973 = vmatpush1.msra.mxu0 0.0
      %1974 = vmatprep.subr.mxu0 0.0
      %1975 = vmatpush1.msra.mxu0 0.0
      %1976 = vmatprep.subr.mxu0 0.0
      %1977 = vmatpush1.msra.mxu0 0.0
      %1978 = vmatprep.subr.mxu0 0.0
      %1979 = vmatpush1.msra.mxu0 0.0
      %1980 = vmatprep.subr.mxu0 0.0
      %1981 = vmatpush1.msra.mxu0 0.0
      %1982 = vmatprep.subr.mxu0 0.0
      %1983 = vmatpush1.msra.mxu0 0.0
      %1984 = vmatprep.subr.mxu0 0.0
      %1985 = vmatpush1.msra.mxu0 %v1951
      %1986 = vmatprep.subr.mxu0 0.0
      %1987 = vmatpush1.msra.mxu0 %v1948
      %1988 = vmatprep.subr.mxu0 0.0
      %1989 = vmatpush2.msra.mxu0 0.0
      %1990 = vmatprep.subr.mxu0 0.0
      %1991 = vmatpush2.msra.mxu0 0.0
      %1992 = vmatprep.subr.mxu0 0.0
      %1993 = vmatpush2.msra.mxu0 0.0
      %1994 = vmatprep.subr.mxu0 0.0
      %1995 = vmatpush2.msra.mxu0 0.0
      %1996 = vmatprep.subr.mxu0 0.0
      %1997 = vmatpush2.msra.mxu0 0.0
      %1998 = vmatprep.subr.mxu0 0.0
      %1999 = vmatpush2.msra.mxu0 0.0
      %2000 = vmatprep.subr.mxu0 0.0
      %2001 = vmatpush2.msra.mxu0 0.0
      %2002 = vmatprep.subr.mxu0 0.0
      %2003 = vmatpush2.msra.mxu0 0.0
      %2004 = vmatprep.subr.mxu0 0.0
      %2005 = vmatpush2.msra.mxu0 0.0
      %2006 = vmatprep.subr.mxu0 0.0
      %2007 = vmatpush2.msra.mxu0 0.0
      %2008 = vmatprep.subr.mxu0 0.0
      %2009 = vmatpush2.msra.mxu0 0.0
      %2010 = vmatprep.subr.mxu0 0.0
      %2011 = vmatpush2.msra.mxu0 0.0
      %2012 = vmatprep.subr.mxu0 0.0
      %2013 = vmatpush2.msra.mxu0 0.0
      %2014 = vmatprep.subr.mxu0 0.0
      %2015 = vmatpush2.msra.mxu0 0.0
      %2016 = vmatprep.subr.mxu0 0.0
      %2017 = vmatpush2.msra.mxu0 0.0
      %2018 = vmatprep.subr.mxu0 0.0
      %2019 = vmatpush2.msra.mxu0 0.0
      %2020 = vmatprep.mubr.f32.mxu0 0.0
      %2021 = vmatmul.mubr.f32.gmra.mxu0 %v1954
      %v2022 = vpop.f32.mrf.mxu0
      %v2023 = vadd.f32 0.0, %v2022
      %v2024 = vpop.f32.mrf.mxu0
      %2025 = vdwg.mxu0
      %v2027 = vsel %vm1952, %v444, 0
      %2029 = vmatprep.subr.mxu0 0.0
      %2030 = vmatpush1.msra.mxu0 0.0
      %2031 = vmatprep.subr.mxu0 0.0
      %2032 = vmatpush1.msra.mxu0 0.0
      %2033 = vmatprep.subr.mxu0 0.0
      %2034 = vmatpush1.msra.mxu0 0.0
      %2035 = vmatprep.subr.mxu0 0.0
      %2036 = vmatpush1.msra.mxu0 0.0
      %2037 = vmatprep.subr.mxu0 0.0
      %2038 = vmatpush1.msra.mxu0 0.0
      %2039 = vmatprep.subr.mxu0 0.0
      %2040 = vmatpush1.msra.mxu0 0.0
      %2041 = vmatprep.subr.mxu0 0.0
      %2042 = vmatpush1.msra.mxu0 0.0
      %2043 = vmatprep.subr.mxu0 0.0
      %2044 = vmatpush1.msra.mxu0 0.0
      %2045 = vmatprep.subr.mxu0 0.0
      %2046 = vmatpush1.msra.mxu0 0.0
      %2047 = vmatprep.subr.mxu0 0.0
      %2048 = vmatpush1.msra.mxu0 0.0
      %2049 = vmatprep.subr.mxu0 0.0
      %2050 = vmatpush1.msra.mxu0 0.0
      %2051 = vmatprep.subr.mxu0 0.0
      %2052 = vmatpush1.msra.mxu0 0.0
      %2053 = vmatprep.subr.mxu0 0.0
      %2054 = vmatpush1.msra.mxu0 0.0
      %2055 = vmatprep.subr.mxu0 0.0
      %2056 = vmatpush1.msra.mxu0 0.0
      %2057 = vmatprep.subr.mxu0 0.0
      %2058 = vmatpush1.msra.mxu0 %v1945
      %2059 = vmatprep.subr.mxu0 0.0
      %2060 = vmatpush1.msra.mxu0 %v1942
      %2061 = vmatprep.subr.mxu0 0.0
      %2062 = vmatpush2.msra.mxu0 0.0
      %2063 = vmatprep.subr.mxu0 0.0
      %2064 = vmatpush2.msra.mxu0 0.0
      %2065 = vmatprep.subr.mxu0 0.0
      %2066 = vmatpush2.msra.mxu0 0.0
      %2067 = vmatprep.subr.mxu0 0.0
      %2068 = vmatpush2.msra.mxu0 0.0
      %2069 = vmatprep.subr.mxu0 0.0
      %2070 = vmatpush2.msra.mxu0 0.0
      %2071 = vmatprep.subr.mxu0 0.0
      %2072 = vmatpush2.msra.mxu0 0.0
      %2073 = vmatprep.subr.mxu0 0.0
      %2074 = vmatpush2.msra.mxu0 0.0
      %2075 = vmatprep.subr.mxu0 0.0
      %2076 = vmatpush2.msra.mxu0 0.0
      %2077 = vmatprep.subr.mxu0 0.0
      %2078 = vmatpush2.msra.mxu0 0.0
      %2079 = vmatprep.subr.mxu0 0.0
      %2080 = vmatpush2.msra.mxu0 0.0
      %2081 = vmatprep.subr.mxu0 0.0
      %2082 = vmatpush2.msra.mxu0 0.0
      %2083 = vmatprep.subr.mxu0 0.0
      %2084 = vmatpush2.msra.mxu0 0.0
      %2085 = vmatprep.subr.mxu0 0.0
      %2086 = vmatpush2.msra.mxu0 0.0
      %2087 = vmatprep.subr.mxu0 0.0
      %2088 = vmatpush2.msra.mxu0 0.0
      %2089 = vmatprep.subr.mxu0 0.0
      %2090 = vmatpush2.msra.mxu0 0.0
      %2091 = vmatprep.subr.mxu0 0.0
      %2092 = vmatpush2.msra.mxu0 0.0
      %2093 = vmatprep.mubr.f32.mxu0 0.0
      %2094 = vmatmul.mubr.f32.gmra.mxu0 %v2027
      %v2095 = vpop.f32.mrf.mxu0
      %v2096 = vadd.f32 %v2023, %v2095
      %v2097 = vpop.f32.mrf.mxu0
      %2098 = vdwg.mxu0
      %v2099 = vmax.f32 %v2096, 0.0
      %vm2100 = vcmask 15360
      %v2102 = vsel %vm2100, %v446, 0
      %v2105 = vsel %vm2100, %v447, 0
      %vm2107 = vcmask 1041408
      %v2109 = vsel %vm2107, %v2099, 0
      %2111 = vmatprep.subr.mxu0 0.0
      %2112 = vmatpush1.msra.mxu0 0.0
      %2113 = vmatprep.subr.mxu0 0.0
      %2114 = vmatpush1.msra.mxu0 0.0
      %2115 = vmatprep.subr.mxu0 0.0
      %2116 = vmatpush1.msra.mxu0 0.0
      %2117 = vmatprep.subr.mxu0 0.0
      %2118 = vmatpush1.msra.mxu0 0.0
      %2119 = vmatprep.subr.mxu0 0.0
      %2120 = vmatpush1.msra.mxu0 0.0
      %2121 = vmatprep.subr.mxu0 0.0
      %2122 = vmatpush1.msra.mxu0 0.0
      %2123 = vmatprep.subr.mxu0 0.0
      %2124 = vmatpush1.msra.mxu0 0.0
      %2125 = vmatprep.subr.mxu0 0.0
      %2126 = vmatpush1.msra.mxu0 0.0
      %2127 = vmatprep.subr.mxu0 0.0
      %2128 = vmatpush1.msra.mxu0 0.0
      %2129 = vmatprep.subr.mxu0 0.0
      %2130 = vmatpush1.msra.mxu0 0.0
      %2131 = vmatprep.subr.mxu0 0.0
      %2132 = vmatpush1.msra.mxu0 0.0
      %2133 = vmatprep.subr.mxu0 0.0
      %2134 = vmatpush1.msra.mxu0 0.0
      %2135 = vmatprep.subr.mxu0 0.0
      %2136 = vmatpush1.msra.mxu0 0.0
      %2137 = vmatprep.subr.mxu0 0.0
      %2138 = vmatpush1.msra.mxu0 0.0
      %2139 = vmatprep.subr.mxu0 0.0
      %2140 = vmatpush1.msra.mxu0 0.0
      %2141 = vmatprep.subr.mxu0 0.0
      %2142 = vmatpush1.msra.mxu0 %v2109
      %2143 = vmatprep.subr.mxu0 0.0
      %2144 = vmatpush2.msra.mxu0 0.0
      %2145 = vmatprep.subr.mxu0 0.0
      %2146 = vmatpush2.msra.mxu0 0.0
      %2147 = vmatprep.subr.mxu0 0.0
      %2148 = vmatpush2.msra.mxu0 0.0
      %2149 = vmatprep.subr.mxu0 0.0
      %2150 = vmatpush2.msra.mxu0 0.0
      %2151 = vmatprep.subr.mxu0 0.0
      %2152 = vmatpush2.msra.mxu0 0.0
      %2153 = vmatprep.subr.mxu0 0.0
      %2154 = vmatpush2.msra.mxu0 0.0
      %2155 = vmatprep.subr.mxu0 0.0
      %2156 = vmatpush2.msra.mxu0 0.0
      %2157 = vmatprep.subr.mxu0 0.0
      %2158 = vmatpush2.msra.mxu0 0.0
      %2159 = vmatprep.subr.mxu0 0.0
      %2160 = vmatpush2.msra.mxu0 0.0
      %2161 = vmatprep.subr.mxu0 0.0
      %2162 = vmatpush2.msra.mxu0 0.0
      %2163 = vmatprep.subr.mxu0 0.0
      %2164 = vmatpush2.msra.mxu0 0.0
      %2165 = vmatprep.subr.mxu0 0.0
      %2166 = vmatpush2.msra.mxu0 0.0
      %2167 = vmatprep.subr.mxu0 0.0
      %2168 = vmatpush2.msra.mxu0 0.0
      %2169 = vmatprep.subr.mxu0 0.0
      %2170 = vmatpush2.msra.mxu0 0.0
      %2171 = vmatprep.subr.mxu0 0.0
      %2172 = vmatpush2.msra.mxu0 0.0
      %2173 = vmatprep.subr.mxu0 0.0
      %2174 = vmatpush2.msra.mxu0 0.0
      %2175 = vmatprep.mubr.f32.mxu0 0.0
      %2176 = vmatmul.mubr.f32.gmra.mxu0 %v2102
      %v2177 = vpop.f32.mrf.mxu0
      %v2178 = vadd.f32 0.0, %v2177
      %v2179 = vpop.f32.mrf.mxu0
      %2180 = vmatprep.mubr.f32.mxu0 0.0
      %2181 = vmatmul.mubr.f32.gmra.mxu0 %v2105
      %v2182 = vpop.f32.mrf.mxu0
      %v2183 = vadd.f32 0.0, %v2182
      %v2184 = vpop.f32.mrf.mxu0
      %2185 = vdwg.mxu0
      %v2187 = vsel %vm2100, %v448, 0
      %v2190 = vsel %vm2100, %v449, 0
      %2192 = vmatprep.subr.mxu0 0.0
      %2193 = vmatpush1.msra.mxu0 0.0
      %2194 = vmatprep.subr.mxu0 0.0
      %2195 = vmatpush1.msra.mxu0 0.0
      %2196 = vmatprep.subr.mxu0 0.0
      %2197 = vmatpush1.msra.mxu0 0.0
      %2198 = vmatprep.subr.mxu0 0.0
      %2199 = vmatpush1.msra.mxu0 0.0
      %2200 = vmatprep.subr.mxu0 0.0
      %2201 = vmatpush1.msra.mxu0 0.0
      %2202 = vmatprep.subr.mxu0 0.0
      %2203 = vmatpush1.msra.mxu0 0.0
      %2204 = vmatprep.subr.mxu0 0.0
      %2205 = vmatpush1.msra.mxu0 0.0
      %2206 = vmatprep.subr.mxu0 0.0
      %2207 = vmatpush1.msra.mxu0 0.0
      %2208 = vmatprep.subr.mxu0 0.0
      %2209 = vmatpush1.msra.mxu0 0.0
      %2210 = vmatprep.subr.mxu0 0.0
      %2211 = vmatpush1.msra.mxu0 0.0
      %2212 = vmatprep.subr.mxu0 0.0
      %2213 = vmatpush1.msra.mxu0 0.0
      %2214 = vmatprep.subr.mxu0 0.0
      %2215 = vmatpush1.msra.mxu0 0.0
      %2216 = vmatprep.subr.mxu0 0.0
      %2217 = vmatpush1.msra.mxu0 0.0
      %2218 = vmatprep.subr.mxu0 0.0
      %2219 = vmatpush1.msra.mxu0 0.0
      %2220 = vmatprep.subr.mxu0 0.0
      %2221 = vmatpush1.msra.mxu0 0.0
      %2222 = vmatprep.subr.mxu0 0.0
      %2223 = vmatpush1.msra.mxu0 %v2109
      %2224 = vmatprep.subr.mxu0 0.0
      %2225 = vmatpush2.msra.mxu0 0.0
      %2226 = vmatprep.subr.mxu0 0.0
      %2227 = vmatpush2.msra.mxu0 0.0
      %2228 = vmatprep.subr.mxu0 0.0
      %2229 = vmatpush2.msra.mxu0 0.0
      %2230 = vmatprep.subr.mxu0 0.0
      %2231 = vmatpush2.msra.mxu0 0.0
      %2232 = vmatprep.subr.mxu0 0.0
      %2233 = vmatpush2.msra.mxu0 0.0
      %2234 = vmatprep.subr.mxu0 0.0
      %2235 = vmatpush2.msra.mxu0 0.0
      %2236 = vmatprep.subr.mxu0 0.0
      %2237 = vmatpush2.msra.mxu0 0.0
      %2238 = vmatprep.subr.mxu0 0.0
      %2239 = vmatpush2.msra.mxu0 0.0
      %2240 = vmatprep.subr.mxu0 0.0
      %2241 = vmatpush2.msra.mxu0 0.0
      %2242 = vmatprep.subr.mxu0 0.0
      %2243 = vmatpush2.msra.mxu0 0.0
      %2244 = vmatprep.subr.mxu0 0.0
      %2245 = vmatpush2.msra.mxu0 0.0
      %2246 = vmatprep.subr.mxu0 0.0
      %2247 = vmatpush2.msra.mxu0 0.0
      %2248 = vmatprep.subr.mxu0 0.0
      %2249 = vmatpush2.msra.mxu0 0.0
      %2250 = vmatprep.subr.mxu0 0.0
      %2251 = vmatpush2.msra.mxu0 0.0
      %2252 = vmatprep.subr.mxu0 0.0
      %2253 = vmatpush2.msra.mxu0 0.0
      %2254 = vmatprep.subr.mxu0 0.0
      %2255 = vmatpush2.msra.mxu0 0.0
      %2256 = vmatprep.mubr.f32.mxu0 0.0
      %2257 = vmatmul.mubr.f32.gmra.mxu0 %v2187
      %v2258 = vpop.f32.mrf.mxu0
      %v2259 = vadd.f32 0.0, %v2258
      %v2260 = vpop.f32.mrf.mxu0
      %2261 = vmatprep.mubr.f32.mxu0 0.0
      %2262 = vmatmul.mubr.f32.gmra.mxu0 %v2190
      %v2263 = vpop.f32.mrf.mxu0
      %v2264 = vadd.f32 0.0, %v2263
      %v2265 = vpop.f32.mrf.mxu0
      %2266 = vdwg.mxu0
      %v2267 = vsub.f32 0.0, %v2178
      %v2268 = vsub.f32 0.0, %v2183
      %v2269 = vmul.f32 %v2267, 1.442695
      %v2270 = vpow.pop %v2269
      %v2271 = vmul.f32 %v2268, 1.442695
      %v2272 = vpow.pop %v2271
      %v2273 = vadd.f32 %v2270, 1.0
      %v2274 = vadd.f32 %v2272, 1.0
      %v2275 = vrcp.pop %v2273
      %v2276 = vmul.f32 1.0, %v2275
      %v2277 = vrcp.pop %v2274
      %v2278 = vmul.f32 1.0, %v2277
      %2280 = vset.pattern.permute.xlu0 0
      %2281 = vperm.xlu0 %2280, %v2276
      %v2282 = vpop.permute.xlu0 %2281
      %2285 = vset.pattern.permute.xlu0 0
      %2286 = vperm.xlu0 %2285, %v2278
      %v2287 = vpop.permute.xlu0 %2286
      %v2289 = vmul.f32 %v1932, %v2282
      %v2290 = vmul.f32 %v1933, %v2282
      %v2291 = vmul.f32 %v1934, %v2287
      %v2292 = vmul.f32 %v1935, %v2287
      %v2293 = vsub.f32 0.0, %v2259
      %v2294 = vsub.f32 0.0, %v2264
      %v2295 = vmul.f32 %v2293, 1.442695
      %v2296 = vpow.pop %v2295
      %v2297 = vmul.f32 %v2294, 1.442695
      %v2298 = vpow.pop %v2297
      %v2299 = vadd.f32 %v2296, 1.0
      %v2300 = vadd.f32 %v2298, 1.0
      %v2301 = vrcp.pop %v2299
      %v2302 = vmul.f32 1.0, %v2301
      %v2303 = vrcp.pop %v2300
      %v2304 = vmul.f32 1.0, %v2303
      %2306 = vset.pattern.permute.xlu0 0
      %2307 = vperm.xlu0 %2306, %v2302
      %v2308 = vpop.permute.xlu0 %2307
      %2311 = vset.pattern.permute.xlu0 0
      %2312 = vperm.xlu0 %2311, %v2304
      %v2313 = vpop.permute.xlu0 %2312
      %v2315 = vmul.f32 %v1936, %v2308
      %v2316 = vmul.f32 %v1937, %v2308
      %v2317 = vmul.f32 %v1938, %v2313
      %v2318 = vmul.f32 %v1939, %v2313
      %v2320 = vsel %vm1952, %v442, 0
      %v2323 = vsel %vm1952, %v443, 0
      %2325 = vmatprep.subr.mxu0 0.0
      %2326 = vmatpush1.msra.mxu0 0.0
      %2327 = vmatprep.subr.mxu0 0.0
      %2328 = vmatpush1.msra.mxu0 0.0
      %2329 = vmatprep.subr.mxu0 0.0
      %2330 = vmatpush1.msra.mxu0 0.0
      %2331 = vmatprep.subr.mxu0 0.0
      %2332 = vmatpush1.msra.mxu0 0.0
      %2333 = vmatprep.subr.mxu0 0.0
      %2334 = vmatpush1.msra.mxu0 0.0
      %2335 = vmatprep.subr.mxu0 0.0
      %2336 = vmatpush1.msra.mxu0 0.0
      %2337 = vmatprep.subr.mxu0 0.0
      %2338 = vmatpush1.msra.mxu0 0.0
      %2339 = vmatprep.subr.mxu0 0.0
      %2340 = vmatpush1.msra.mxu0 0.0
      %2341 = vmatprep.subr.mxu0 0.0
      %2342 = vmatpush1.msra.mxu0 0.0
      %2343 = vmatprep.subr.mxu0 0.0
      %2344 = vmatpush1.msra.mxu0 0.0
      %2345 = vmatprep.subr.mxu0 0.0
      %2346 = vmatpush1.msra.mxu0 0.0
      %2347 = vmatprep.subr.mxu0 0.0
      %2348 = vmatpush1.msra.mxu0 0.0
      %2349 = vmatprep.subr.mxu0 0.0
      %2350 = vmatpush1.msra.mxu0 0.0
      %2351 = vmatprep.subr.mxu0 0.0
      %2352 = vmatpush1.msra.mxu0 0.0
      %2353 = vmatprep.subr.mxu0 %v2318
      %2354 = vmatpush1.msra.mxu0 %v2317
      %2355 = vmatprep.subr.mxu0 %v2316
      %2356 = vmatpush1.msra.mxu0 %v2315
      %2357 = vmatprep.subr.mxu0 0.0
      %2358 = vmatpush2.msra.mxu0 0.0
      %2359 = vmatprep.subr.mxu0 0.0
      %2360 = vmatpush2.msra.mxu0 0.0
      %2361 = vmatprep.subr.mxu0 0.0
      %2362 = vmatpush2.msra.mxu0 0.0
      %2363 = vmatprep.subr.mxu0 0.0
      %2364 = vmatpush2.msra.mxu0 0.0
      %2365 = vmatprep.subr.mxu0 0.0
      %2366 = vmatpush2.msra.mxu0 0.0
      %2367 = vmatprep.subr.mxu0 0.0
      %2368 = vmatpush2.msra.mxu0 0.0
      %2369 = vmatprep.subr.mxu0 0.0
      %2370 = vmatpush2.msra.mxu0 0.0
      %2371 = vmatprep.subr.mxu0 0.0
      %2372 = vmatpush2.msra.mxu0 0.0
      %2373 = vmatprep.subr.mxu0 0.0
      %2374 = vmatpush2.msra.mxu0 0.0
      %2375 = vmatprep.subr.mxu0 0.0
      %2376 = vmatpush2.msra.mxu0 0.0
      %2377 = vmatprep.subr.mxu0 0.0
      %2378 = vmatpush2.msra.mxu0 0.0
      %2379 = vmatprep.subr.mxu0 0.0
      %2380 = vmatpush2.msra.mxu0 0.0
      %2381 = vmatprep.subr.mxu0 0.0
      %2382 = vmatpush2.msra.mxu0 0.0
      %2383 = vmatprep.subr.mxu0 0.0
      %2384 = vmatpush2.msra.mxu0 0.0
      %2385 = vmatprep.subr.mxu0 0.0
      %2386 = vmatpush2.msra.mxu0 0.0
      %2387 = vmatprep.subr.mxu0 0.0
      %2388 = vmatpush2.msra.mxu0 0.0
      %2389 = vmatprep.mubr.f32.mxu0 0.0
      %2390 = vmatmul.mubr.f32.gmra.mxu0 %v2320
      %v2391 = vpop.f32.mrf.mxu0
      %v2392 = vadd.f32 0.0, %v2391
      %v2393 = vpop.f32.mrf.mxu0
      %v2394 = vadd.f32 0.0, %v2393
      %2395 = vmatprep.mubr.f32.mxu0 0.0
      %2396 = vmatmul.mubr.f32.gmra.mxu0 %v2323
      %v2397 = vpop.f32.mrf.mxu0
      %v2398 = vadd.f32 0.0, %v2397
      %v2399 = vpop.f32.mrf.mxu0
      %v2400 = vadd.f32 0.0, %v2399
      %2401 = vdwg.mxu0
      %v2403 = vsel %vm1952, %v440, 0
      %v2406 = vsel %vm1952, %v441, 0
      %2408 = vmatprep.subr.mxu0 0.0
      %2409 = vmatpush1.msra.mxu0 0.0
      %2410 = vmatprep.subr.mxu0 0.0
      %2411 = vmatpush1.msra.mxu0 0.0
      %2412 = vmatprep.subr.mxu0 0.0
      %2413 = vmatpush1.msra.mxu0 0.0
      %2414 = vmatprep.subr.mxu0 0.0
      %2415 = vmatpush1.msra.mxu0 0.0
      %2416 = vmatprep.subr.mxu0 0.0
      %2417 = vmatpush1.msra.mxu0 0.0
      %2418 = vmatprep.subr.mxu0 0.0
      %2419 = vmatpush1.msra.mxu0 0.0
      %2420 = vmatprep.subr.mxu0 0.0
      %2421 = vmatpush1.msra.mxu0 0.0
      %2422 = vmatprep.subr.mxu0 0.0
      %2423 = vmatpush1.msra.mxu0 0.0
      %2424 = vmatprep.subr.mxu0 0.0
      %2425 = vmatpush1.msra.mxu0 0.0
      %2426 = vmatprep.subr.mxu0 0.0
      %2427 = vmatpush1.msra.mxu0 0.0
      %2428 = vmatprep.subr.mxu0 0.0
      %2429 = vmatpush1.msra.mxu0 0.0
      %2430 = vmatprep.subr.mxu0 0.0
      %2431 = vmatpush1.msra.mxu0 0.0
      %2432 = vmatprep.subr.mxu0 0.0
      %2433 = vmatpush1.msra.mxu0 0.0
      %2434 = vmatprep.subr.mxu0 0.0
      %2435 = vmatpush1.msra.mxu0 0.0
      %2436 = vmatprep.subr.mxu0 %v2292
      %2437 = vmatpush1.msra.mxu0 %v2291
      %2438 = vmatprep.subr.mxu0 %v2290
      %2439 = vmatpush1.msra.mxu0 %v2289
      %2440 = vmatprep.subr.mxu0 0.0
      %2441 = vmatpush2.msra.mxu0 0.0
      %2442 = vmatprep.subr.mxu0 0.0
      %2443 = vmatpush2.msra.mxu0 0.0
      %2444 = vmatprep.subr.mxu0 0.0
      %2445 = vmatpush2.msra.mxu0 0.0
      %2446 = vmatprep.subr.mxu0 0.0
      %2447 = vmatpush2.msra.mxu0 0.0
      %2448 = vmatprep.subr.mxu0 0.0
      %2449 = vmatpush2.msra.mxu0 0.0
      %2450 = vmatprep.subr.mxu0 0.0
      %2451 = vmatpush2.msra.mxu0 0.0
      %2452 = vmatprep.subr.mxu0 0.0
      %2453 = vmatpush2.msra.mxu0 0.0
      %2454 = vmatprep.subr.mxu0 0.0
      %2455 = vmatpush2.msra.mxu0 0.0
      %2456 = vmatprep.subr.mxu0 0.0
      %2457 = vmatpush2.msra.mxu0 0.0
      %2458 = vmatprep.subr.mxu0 0.0
      %2459 = vmatpush2.msra.mxu0 0.0
      %2460 = vmatprep.subr.mxu0 0.0
      %2461 = vmatpush2.msra.mxu0 0.0
      %2462 = vmatprep.subr.mxu0 0.0
      %2463 = vmatpush2.msra.mxu0 0.0
      %2464 = vmatprep.subr.mxu0 0.0
      %2465 = vmatpush2.msra.mxu0 0.0
      %2466 = vmatprep.subr.mxu0 0.0
      %2467 = vmatpush2.msra.mxu0 0.0
      %2468 = vmatprep.subr.mxu0 0.0
      %2469 = vmatpush2.msra.mxu0 0.0
      %2470 = vmatprep.subr.mxu0 0.0
      %2471 = vmatpush2.msra.mxu0 0.0
      %2472 = vmatprep.mubr.f32.mxu0 0.0
      %2473 = vmatmul.mubr.f32.gmra.mxu0 %v2403
      %v2474 = vpop.f32.mrf.mxu0
      %v2475 = vadd.f32 %v2392, %v2474
      %v2476 = vpop.f32.mrf.mxu0
      %v2477 = vadd.f32 %v2394, %v2476
      %2478 = vmatprep.mubr.f32.mxu0 0.0
      %2479 = vmatmul.mubr.f32.gmra.mxu0 %v2406
      %v2480 = vpop.f32.mrf.mxu0
      %v2481 = vadd.f32 %v2398, %v2480
      %v2482 = vpop.f32.mrf.mxu0
      %v2483 = vadd.f32 %v2400, %v2482
      %2484 = vdwg.mxu0
      %2486 = vset.pattern.permute.xlu0 0
      %2487 = vperm.xlu0 %2486, %v438
      %v2488 = vpop.permute.xlu0 %2487
      %2491 = vset.pattern.permute.xlu0 0
      %2492 = vperm.xlu0 %2491, %v439
      %v2493 = vpop.permute.xlu0 %2492
      %v2495 = vadd.f32 %v2475, %v2488
      %v2496 = vadd.f32 %v2477, %v2488
      %v2497 = vadd.f32 %v2481, %v2493
      %v2498 = vadd.f32 %v2483, %v2493
      %v2499 = vmul.f32 %v2495, %v1925
      %v2500 = vmul.f32 %v2496, %v1929
      %v2501 = vmul.f32 %v2497, %v1925
      %v2502 = vmul.f32 %v2498, %v1929
      %2503 = vst [vmem:[%s435] sm:$0xff] %v2499
      %2504 = vst [vmem:[%s435 + $0x8] sm:$0xff] %v2500
      %2505 = vst [vmem:[%s435 + $0x10] sm:$0xff] %v2501
      %2506 = vst [vmem:[%s435 + $0x18] sm:$0xff] %v2502
      %p2507 = scmp.lt.s32.totalorder %s25, 1
      %s2508 = scalar_select %p2507, %s25, 1
      %s2509 = smul.addr %s2508, 4
      %s2510 = smul.addr %s2509, 8
      %s2511 = scalar_lea.vmem %s12, %s2510
      // Predicated region
      $region69: #{camf_forward.1} parent=67 // pred_check
        %p2512 = pneg %p305
      $region70: #{camf_forward.1} parent=67 // pred_check_branch
        %2514 = sbr.rel (%p2512) target = $region72
      $region71: #{camf_forward.1} parent=67 // pred_region
        _
      $region72: #{camf_forward.1} parent=67 // pred_fallthru
        _
    $region68: #{camf_forward.1} parent=5 // pred_fallthru
      _
    %p2515 = scmp.le.s32.totalorder 2, %s20
    // Predicated region
    $region73: #{camf_forward.1} parent=5 // pred_check
      %p2516 = pneg %p2515
    $region74: #{camf_forward.1} parent=5 // pred_check_branch
      %2518 = sbr.rel (%p2516) target = $region76
    $region75: #{camf_forward.1} parent=5 // pred_region
      %s2519 = ssub.s32 %s20, 2
      // Predicated region
      $region77: #{camf_forward.1} parent=75 // pred_check
        %p2520 = pneg %p311
      $region78: #{camf_forward.1} parent=75 // pred_check_branch
        %2522 = sbr.rel (%p2520) target = $region80
      $region79: #{camf_forward.1} parent=75 // pred_region
        %p2523 = scmp.lt.s32.totalorder %s26, 1
        %s2524 = scalar_select %p2523, %s26, 1
        %s2525 = smul.addr %s2524, 4
        %s2526 = smul.addr %s2525, 8
        %s2527 = scalar_lea.vmem %s12, %s2526
      $region80: #{camf_forward.1} parent=75 // pred_fallthru
        _
    $region76: #{camf_forward.1} parent=5 // pred_fallthru
      _
  $region6: #{camf_forward.1} parent=0 // loop_footer
    %s24 = sadd.s32 1, %s20
  $region7: #{camf_forward.1} parent=0 // loop_footer_branch
    %19 = sbr.rel target = $region3
  $region8: #{camf_forward.1} parent=0 // loop_exit
    _

</llo_original>
